<compile_context>
chip_gen: v5e
topology: v5e:2x2
jax: 0.10.0
libtpu: 0.0.40
codegen_flags: <defaults>
</compile_context>

<pallas_src>
import functools

import jax
import jax.numpy as jnp
from jax.experimental import pallas as pl
from jax.experimental.pallas import tpu as pltpu

INPUT_MEAN = jnp.array([0.2788, 0.2657, 0.2629], jnp.float32)
INPUT_STD = jnp.array([0.2064, 0.1944, 0.2252], jnp.float32)


# ----------------------------------------------------------------------------
# Fused kernel: stem conv -> residual blocks -> head, all VMEM-resident.
# ----------------------------------------------------------------------------
def _fused_classifier_kernel(*refs, stem_hw, block_geoms, matmul_dtype):
    nb = len(block_geoms)
    xcol_ref, stem_w_ref, stem_b_ref = refs[0], refs[1], refs[2]
    blk_refs = refs[3:3 + 2 * nb]
    head_w_ref = refs[3 + 2 * nb]
    head_b_ref = refs[4 + 2 * nb]
    o_ref = refs[5 + 2 * nb]
    pad_refs = refs[6 + 2 * nb:]          # per-block zero-padded input scratch

    h1, w1, c0 = stem_hw

    # ---- stem: 11x11 stride-2 conv as ONE im2col matmul (K=363), bias, ReLU --
    acc = jnp.dot(xcol_ref[0], stem_w_ref[...],
                  preferred_element_type=jnp.float32)          # (h1*w1, c0) f32
    z = jnp.maximum(acc + stem_b_ref[...], 0.0).reshape(h1, w1, c0)

    # ---- residual blocks: one packed (main|skip) matmul per block ------------
    for i, (hin, win, cin, cout) in enumerate(block_geoms):
        zp = pad_refs[i]                                        # (hin+2, win+2, cin)
        zp[...] = jnp.zeros(zp.shape, zp.dtype)
        zp[1:hin + 1, 1:win + 1, :] = z                         # zero-padded input
        ho = (hin - 1) // 2 + 1
        wo = (win - 1) // 2 + 1
        # Build im2col patch matrix (ho*wo, 9*cin) from 9 strided taps.
        cols = []
        for kh in range(3):
            for kw in range(3):
                tap = zp[pl.ds(kh, ho, stride=2), pl.ds(kw, wo, stride=2), :]
                cols.append(tap.reshape(ho * wo, cin))
        pm = jnp.concatenate(cols, axis=-1).astype(matmul_dtype)
        # Single matmul against packed [main(BN-folded) | skip] weights.
        acc = jnp.dot(pm, blk_refs[2 * i][...],
                      preferred_element_type=jnp.float32)       # (ho*wo, 2*cout)
        acc = acc + blk_refs[2 * i + 1][...]                    # packed biases
        main = jnp.maximum(acc[:, :cout], 0.0)                  # conv+BN+ReLU path
        skip = acc[:, cout:]                                    # skip conv path
        z = (main + skip).reshape(ho, wo, cout)

    # ---- head: global average pool + 1x1 conv (= pooled @ W + b) ------------
    hf, wf, cf = z.shape
    pooled = jnp.mean(z.reshape(hf * wf, cf), axis=0, keepdims=True)    # (1, cf)
    logits = jnp.dot(pooled.astype(matmul_dtype), head_w_ref[...],
                     preferred_element_type=jnp.float32) + head_b_ref[...]
    o_ref[...] = logits.reshape(1, 1, logits.shape[-1])


# ----------------------------------------------------------------------------
# Wrapper-side layout glue
# ----------------------------------------------------------------------------
def _im2col_nhwc(x, kh_sz, kw_sz, stride, padding):
    """(B, H, W, C) -> (B, Ho*Wo, KH*KW*C) patch matrix (pure XLA layout op)."""
    B, H, W, C = x.shape
    Ho = (H + 2 * padding - kh_sz) // stride + 1
    Wo = (W + 2 * padding - kw_sz) // stride + 1
    xp = jnp.pad(x, ((0, 0), (padding, padding), (padding, padding), (0, 0)))
    cols = []
    for kh in range(kh_sz):
        for kw in range(kw_sz):
            sl = jax.lax.slice(
                xp, (0, kh, kw, 0),
                (B, kh + (Ho - 1) * stride + 1, kw + (Wo - 1) * stride + 1, C),
                (1, stride, stride, 1))
            cols.append(sl.reshape(B, Ho * Wo, C))
    return jnp.concatenate(cols, axis=-1)


def _pack_params(params, mdt):
    """Fold BN into the main conv, pack main|skip weights, flatten for im2col."""
    ws = params["stem_w"]
    KH, KW, Cin, C0 = ws.shape
    stem_w2 = ws.reshape(KH * KW * Cin, C0).astype(mdt)
    stem_b = params["stem_b"].astype(jnp.float32)

    blocks = []
    for blk in params["blocks"]:
        wm, bm = blk["wm"], blk["bm"]
        w_skip, b_skip = blk["ws"], blk["bs"]
        scale, shift = blk["scale"], blk["shift"]          # eval-mode BN folding
        wm_f = wm * scale.reshape(1, 1, 1, -1)
        bm_f = bm * scale + shift
        kh, kw, cin, cout = wm.shape
        w_pack = jnp.concatenate([wm_f, w_skip], axis=-1)
        w_pack = w_pack.reshape(kh * kw * cin, 2 * cout).astype(mdt)
        b_pack = jnp.concatenate([bm_f, b_skip], axis=-1).astype(jnp.float32)
        blocks.append((w_pack, b_pack))

    head_w = params["head_w"].astype(mdt)
    head_b = params["head_b"].astype(jnp.float32)
    return stem_w2, stem_b, blocks, head_w, head_b


@functools.partial(jax.jit, static_argnames=("use_bf16",))
def classifier_forward(params, x_nchw, *, use_bf16=True):
    """x_nchw: (B, 3, H, W) like the PyTorch module; returns (B, num_classes)."""
    mdt = jnp.bfloat16 if use_bf16 else jnp.float32
    x = jnp.transpose(x_nchw, (0, 2, 3, 1)).astype(jnp.float32)     # NCHW -> NHWC
    B, H, W, Cimg = x.shape

    # Normalization is folded into the (fused) XLA producer of the stem patch
    # matrix — no Pallas kernel, no extra HBM pass of the input.
    xn = (x - INPUT_MEAN.reshape(1, 1, 1, -1)) / INPUT_STD.reshape(1, 1, 1, -1)

    stem_w = params["stem_w"]
    KH, KW, _, C0 = stem_w.shape
    stride0, pad0 = 2, 5
    H1 = (H + 2 * pad0 - KH) // stride0 + 1
    W1 = (W + 2 * pad0 - KW) // stride0 + 1
    kstem = KH * KW * Cimg
    xcol = _im2col_nhwc(xn, KH, KW, stride0, pad0).astype(mdt)  # (B, H1*W1, 363)

    stem_w2, stem_b, blocks_packed, head_w, head_b = _pack_params(params, mdt)

    # Static per-block geometry: (Hin, Win, Cin, Cout).
    block_geoms = []
    hin, win, cin = H1, W1, C0
    for (w_pack, _) in blocks_packed:
        cout = w_pack.shape[1] // 2
        block_geoms.append((hin, win, cin, cout))
        hin = (hin - 1) // 2 + 1
        win = (win - 1) // 2 + 1
        cin = cout
    nb = len(block_geoms)
    nc = head_w.shape[1]

    kern = functools.partial(
        _fused_classifier_kernel,
        stem_hw=(H1, W1, C0),
        block_geoms=tuple(block_geoms),
        matmul_dtype=mdt,
    )

    flat_blk = [a for pair in blocks_packed for a in pair]
    weight_arrays = [stem_w2, stem_b] + flat_blk + [head_w, head_b]  # all 2-D

    in_specs = [pl.BlockSpec((1, H1 * W1, kstem), lambda b: (b, 0, 0))]
    in_specs += [pl.BlockSpec(a.shape, lambda b: (0, 0)) for a in weight_arrays]

    scratch_shapes = [pltpu.VMEM((g[0] + 2, g[1] + 2, g[2]), jnp.float32)
                      for g in block_geoms]

    out = pl.pallas_call(
        kern,
        grid=(B,),
        in_specs=in_specs,
        out_specs=pl.BlockSpec((1, 1, nc), lambda b: (b, 0, 0)),
        out_shape=jax.ShapeDtypeStruct((B, 1, nc), jnp.float32),
        scratch_shapes=scratch_shapes,
        compiler_params=pltpu.CompilerParams(
            dimension_semantics=("parallel",)),
    )(xcol, *weight_arrays)
    return out.reshape(B, nc)


# ----------------------------------------------------------------------------
# Deterministic parameter init (synthetic; mirrors the PyTorch shapes)
# ----------------------------------------------------------------------------
def init_params(key, in_channels=3, num_classes=6, channels_l0=8, n_blocks=3):
    def conv_init(k, kh, kw, cin, cout):
        kw_, kb_ = jax.random.split(k)
        fan_in = cin * kh * kw
        w = jax.random.normal(kw_, (kh, kw, cin, cout), jnp.float32) / jnp.sqrt(fan_in)
        b = 0.1 * jax.random.normal(kb_, (1, cout), jnp.float32)
        return w, b

    keys = jax.random.split(key, n_blocks + 2)
    params = {}
    params["stem_w"], params["stem_b"] = conv_init(keys[0], 11, 11, in_channels, channels_l0)

    blocks = []
    c1 = channels_l0
    eps = 1e-5
    for i in range(n_blocks):
        c2 = c1 * 2
        k = jax.random.split(keys[1 + i], 4)
        wm, bm = conv_init(k[0], 3, 3, c1, c2)
        ws, bs = conv_init(k[1], 3, 3, c1, c2)
        gamma = 1.0 + 0.1 * jax.random.normal(k[2], (1, c2), jnp.float32)
        beta = 0.1 * jax.random.normal(k[3], (1, c2), jnp.float32)
        running_mean = jnp.zeros((1, c2), jnp.float32)
        running_var = jnp.ones((1, c2), jnp.float32)
        scale = gamma / jnp.sqrt(running_var + eps)
        shift = beta - running_mean * scale
        blocks.append(dict(wm=wm, bm=bm, ws=ws, bs=bs, scale=scale, shift=shift))
        c1 = c2
    params["blocks"] = blocks

    kw_, kb_ = jax.random.split(keys[-1])
    params["head_w"] = jax.random.normal(kw_, (c1, num_classes), jnp.float32) / jnp.sqrt(c1)
    params["head_b"] = 0.1 * jax.random.normal(kb_, (1, num_classes), jnp.float32)
    return params


# ----------------------------------------------------------------------------
# Pure-JAX reference (for correctness checks)
# ----------------------------------------------------------------------------
def reference_forward(params, x_nchw):
    x = jnp.transpose(x_nchw, (0, 2, 3, 1)).astype(jnp.float32)
    z = (x - INPUT_MEAN.reshape(1, 1, 1, -1)) / INPUT_STD.reshape(1, 1, 1, -1)

    def conv(z, w, b, stride, padding):
        out = jax.lax.conv_general_dilated(
            z, w, (stride, stride), [(padding, padding)] * 2,
            dimension_numbers=("NHWC", "HWIO", "NHWC"))
        return out + b.reshape(1, 1, 1, -1)

    z = jax.nn.relu(conv(z, params["stem_w"], params["stem_b"], 2, 5))
    for blk in params["blocks"]:
        main = conv(z, blk["wm"], blk["bm"], 2, 1)
        main = jax.nn.relu(main * blk["scale"].reshape(1, 1, 1, -1)
                           + blk["shift"].reshape(1, 1, 1, -1))
        skip = conv(z, blk["ws"], blk["bs"], 2, 1)
        z = main + skip
    c = params["head_w"].shape[0]
    ncls = params["head_w"].shape[1]
    z = conv(z, params["head_w"].reshape(1, 1, c, ncls), params["head_b"], 1, 0)
    return jnp.mean(z, axis=(1, 2))


if __name__ == "__main__":
    key = jax.random.PRNGKey(0)
    pkey, xkey = jax.random.split(key)

    # batch=2, 3 input channels (fixed by INPUT_MEAN/STD), 32x32 images,
    # channels_l0=8, n_blocks=3 -> channels 8 -> 16 -> 32 -> 64.
    params = init_params(pkey, in_channels=3, num_classes=6,
                         channels_l0=8, n_blocks=3)
    x = jax.random.uniform(xkey, (2, 3, 32, 32), jnp.float32)   # NCHW, vals in [0, 1]

    ref = reference_forward(params, x)

    # Tight f32 check (catches im2col / stride / padding off-by-one bugs).
    out_f32 = jax.block_until_ready(classifier_forward(params, x, use_bf16=False))
    assert out_f32.shape == (2, 6), out_f32.shape
    if not bool(jnp.allclose(out_f32, ref, atol=1e-3, rtol=1e-3)):
        raise AssertionError(
            f"f32 Pallas/ref mismatch, max abs err = "
            f"{float(jnp.max(jnp.abs(out_f32 - ref)))}")

    # Default fast path: bf16 matmul inputs, f32 accumulation.
    logits = jax.block_until_ready(classifier_forward(params, x, use_bf16=True))
    assert logits.shape == (2, 6), logits.shape
    if not bool(jnp.allclose(logits, ref, atol=5e-2, rtol=5e-2)):
        raise AssertionError(
            f"bf16 Pallas/ref mismatch, max abs err = "
            f"{float(jnp.max(jnp.abs(logits - ref)))}")

    print("KERNEL_OK")
</pallas_src>

<mosaic_0001>
module attributes {stable_mosaic.version = 11 : i64} {
  func.func @_fused_classifier_kernel(%arg0: i32, %arg1: memref<1x256x363xf32, #tpu.memory_space<vmem>>, %arg2: memref<363x8xf32, #tpu.memory_space<vmem>>, %arg3: memref<1x8xf32, #tpu.memory_space<vmem>>, %arg4: memref<72x32xf32, #tpu.memory_space<vmem>>, %arg5: memref<1x32xf32, #tpu.memory_space<vmem>>, %arg6: memref<144x64xf32, #tpu.memory_space<vmem>>, %arg7: memref<1x64xf32, #tpu.memory_space<vmem>>, %arg8: memref<288x128xf32, #tpu.memory_space<vmem>>, %arg9: memref<1x128xf32, #tpu.memory_space<vmem>>, %arg10: memref<64x6xf32, #tpu.memory_space<vmem>>, %arg11: memref<1x6xf32, #tpu.memory_space<vmem>>, %arg12: memref<1x1x6xf32, #tpu.memory_space<vmem>>, %arg13: memref<18x18x8xf32, #tpu.memory_space<vmem>>, %arg14: memref<10x10x16xf32, #tpu.memory_space<vmem>>, %arg15: memref<6x6x32xf32, #tpu.memory_space<vmem>>) attributes {dimension_semantics = [#tpu.dimension_semantics<parallel>], iteration_bounds = array<i64: 2>, scalar_prefetch = 0 : i64, scratch_operands = 3 : i64, tpu.core_type = #tpu.core_type<tc>, window_params = [{transform_indices = @transform_0, window_bounds = array<i64: 1, 256, 363>}, {pipeline_mode = #tpu.pipeline_mode<synchronous>, transform_indices = @transform_1, window_bounds = array<i64: 363, 8>}, {pipeline_mode = #tpu.pipeline_mode<synchronous>, transform_indices = @transform_2, window_bounds = array<i64: 1, 8>}, {pipeline_mode = #tpu.pipeline_mode<synchronous>, transform_indices = @transform_3, window_bounds = array<i64: 72, 32>}, {pipeline_mode = #tpu.pipeline_mode<synchronous>, transform_indices = @transform_4, window_bounds = array<i64: 1, 32>}, {pipeline_mode = #tpu.pipeline_mode<synchronous>, transform_indices = @transform_5, window_bounds = array<i64: 144, 64>}, {pipeline_mode = #tpu.pipeline_mode<synchronous>, transform_indices = @transform_6, window_bounds = array<i64: 1, 64>}, {pipeline_mode = #tpu.pipeline_mode<synchronous>, transform_indices = @transform_7, window_bounds = array<i64: 288, 128>}, {pipeline_mode = #tpu.pipeline_mode<synchronous>, transform_indices = @transform_8, window_bounds = array<i64: 1, 128>}, {pipeline_mode = #tpu.pipeline_mode<synchronous>, transform_indices = @transform_9, window_bounds = array<i64: 64, 6>}, {pipeline_mode = #tpu.pipeline_mode<synchronous>, transform_indices = @transform_10, window_bounds = array<i64: 1, 6>}, {transform_indices = @transform_11, window_bounds = array<i64: 1, 1, 6>}]} {
    %c0 = arith.constant 0 : index
    %c0_0 = arith.constant 0 : index
    %c0_1 = arith.constant 0 : index
    %0 = vector.load %arg1[%c0, %c0_0, %c0_1] : memref<1x256x363xf32, #tpu.memory_space<vmem>>, vector<1x256x363xf32>
    %1 = vector.shape_cast %0 : vector<1x256x363xf32> to vector<256x363xf32>
    %c0_2 = arith.constant 0 : index
    %c0_3 = arith.constant 0 : index
    %2 = vector.load %arg2[%c0_2, %c0_3] : memref<363x8xf32, #tpu.memory_space<vmem>>, vector<363x8xf32>
    %cst = arith.constant dense<0.000000e+00> : vector<256x8xf32>
    %3 = tpu.matmul %1, %2, %cst {dimension_numbers = #tpu.dot_dimension_numbers<[1], [0], [0], [1], [0, 0, 1, 1], [], []>} : vector<256x363xf32>, vector<363x8xf32>, vector<256x8xf32> -> vector<256x8xf32>
    %c0_4 = arith.constant 0 : index
    %c0_5 = arith.constant 0 : index
    %4 = vector.load %arg3[%c0_4, %c0_5] : memref<1x8xf32, #tpu.memory_space<vmem>>, vector<1x8xf32>
    %5 = vector.broadcast %4 : vector<1x8xf32> to vector<256x8xf32>
    %6 = arith.addf %3, %5 : vector<256x8xf32>
    %cst_6 = arith.constant 0.000000e+00 : f32
    %7 = vector.broadcast %cst_6 : f32 to vector<256x8xf32>
    %8 = arith.maximumf %6, %7 : vector<256x8xf32>
    %9 = vector.shape_cast %8 : vector<256x8xf32> to vector<16x16x8xf32>
    %cst_7 = arith.constant 0.000000e+00 : f32
    %10 = vector.broadcast %cst_7 : f32 to vector<18x18x8xf32>
    %c0_8 = arith.constant 0 : index
    %c0_9 = arith.constant 0 : index
    %c0_10 = arith.constant 0 : index
    %11 = vector.load %arg13[%c0_8, %c0_9, %c0_10] : memref<18x18x8xf32, #tpu.memory_space<vmem>>, vector<18x18x8xf32>
    tpu.vector_store %arg13[%c0_8, %c0_9, %c0_10], %10 {strides = array<i32>} : memref<18x18x8xf32, #tpu.memory_space<vmem>>, vector<18x18x8xf32>,
    %c1 = arith.constant 1 : index
    %c1_11 = arith.constant 1 : index
    %c0_12 = arith.constant 0 : index
    %12 = vector.load %arg13[%c1, %c1_11, %c0_12] : memref<18x18x8xf32, #tpu.memory_space<vmem>>, vector<16x16x8xf32>
    tpu.vector_store %arg13[%c1, %c1_11, %c0_12], %9 {strides = array<i32>} : memref<18x18x8xf32, #tpu.memory_space<vmem>>, vector<16x16x8xf32>,
    %c0_13 = arith.constant 0 : index
    %c0_14 = arith.constant 0 : index
    %c0_15 = arith.constant 0 : index
    %13 = tpu.strided_load %arg13[%c0_13, %c0_14, %c0_15] {strides = array<i32: 2, 2, 1>} : memref<18x18x8xf32, #tpu.memory_space<vmem>>, vector<8x8x8xf32>
    %14 = vector.shape_cast %13 : vector<8x8x8xf32> to vector<64x8xf32>
    %c0_16 = arith.constant 0 : index
    %c1_17 = arith.constant 1 : index
    %c0_18 = arith.constant 0 : index
    %15 = tpu.strided_load %arg13[%c0_16, %c1_17, %c0_18] {strides = array<i32: 2, 2, 1>} : memref<18x18x8xf32, #tpu.memory_space<vmem>>, vector<8x8x8xf32>
    %16 = vector.shape_cast %15 : vector<8x8x8xf32> to vector<64x8xf32>
    %c0_19 = arith.constant 0 : index
    %c2 = arith.constant 2 : index
    %c0_20 = arith.constant 0 : index
    %17 = tpu.strided_load %arg13[%c0_19, %c2, %c0_20] {strides = array<i32: 2, 2, 1>} : memref<18x18x8xf32, #tpu.memory_space<vmem>>, vector<8x8x8xf32>
    %18 = vector.shape_cast %17 : vector<8x8x8xf32> to vector<64x8xf32>
    %c1_21 = arith.constant 1 : index
    %c0_22 = arith.constant 0 : index
    %c0_23 = arith.constant 0 : index
    %19 = tpu.strided_load %arg13[%c1_21, %c0_22, %c0_23] {strides = array<i32: 2, 2, 1>} : memref<18x18x8xf32, #tpu.memory_space<vmem>>, vector<8x8x8xf32>
    %20 = vector.shape_cast %19 : vector<8x8x8xf32> to vector<64x8xf32>
    %c1_24 = arith.constant 1 : index
    %c1_25 = arith.constant 1 : index
    %c0_26 = arith.constant 0 : index
    %21 = tpu.strided_load %arg13[%c1_24, %c1_25, %c0_26] {strides = array<i32: 2, 2, 1>} : memref<18x18x8xf32, #tpu.memory_space<vmem>>, vector<8x8x8xf32>
    %22 = vector.shape_cast %21 : vector<8x8x8xf32> to vector<64x8xf32>
    %c1_27 = arith.constant 1 : index
    %c2_28 = arith.constant 2 : index
    %c0_29 = arith.constant 0 : index
    %23 = tpu.strided_load %arg13[%c1_27, %c2_28, %c0_29] {strides = array<i32: 2, 2, 1>} : memref<18x18x8xf32, #tpu.memory_space<vmem>>, vector<8x8x8xf32>
    %24 = vector.shape_cast %23 : vector<8x8x8xf32> to vector<64x8xf32>
    %c2_30 = arith.constant 2 : index
    %c0_31 = arith.constant 0 : index
    %c0_32 = arith.constant 0 : index
    %25 = tpu.strided_load %arg13[%c2_30, %c0_31, %c0_32] {strides = array<i32: 2, 2, 1>} : memref<18x18x8xf32, #tpu.memory_space<vmem>>, vector<8x8x8xf32>
    %26 = vector.shape_cast %25 : vector<8x8x8xf32> to vector<64x8xf32>
    %c2_33 = arith.constant 2 : index
    %c1_34 = arith.constant 1 : index
    %c0_35 = arith.constant 0 : index
    %27 = tpu.strided_load %arg13[%c2_33, %c1_34, %c0_35] {strides = array<i32: 2, 2, 1>} : memref<18x18x8xf32, #tpu.memory_space<vmem>>, vector<8x8x8xf32>
    %28 = vector.shape_cast %27 : vector<8x8x8xf32> to vector<64x8xf32>
    %c2_36 = arith.constant 2 : index
    %c2_37 = arith.constant 2 : index
    %c0_38 = arith.constant 0 : index
    %29 = tpu.strided_load %arg13[%c2_36, %c2_37, %c0_38] {strides = array<i32: 2, 2, 1>} : memref<18x18x8xf32, #tpu.memory_space<vmem>>, vector<8x8x8xf32>
    %30 = vector.shape_cast %29 : vector<8x8x8xf32> to vector<64x8xf32>
    %31 = tpu.concatenate %14, %16, %18, %20, %22, %24, %26, %28, %30 in 1 : vector<64x8xf32>, vector<64x8xf32>, vector<64x8xf32>, vector<64x8xf32>, vector<64x8xf32>, vector<64x8xf32>, vector<64x8xf32>, vector<64x8xf32>, vector<64x8xf32> -> vector<64x72xf32>
    %c0_39 = arith.constant 0 : index
    %c0_40 = arith.constant 0 : index
    %32 = vector.load %arg4[%c0_39, %c0_40] : memref<72x32xf32, #tpu.memory_space<vmem>>, vector<72x32xf32>
    %cst_41 = arith.constant dense<0.000000e+00> : vector<64x32xf32>
    %33 = tpu.matmul %31, %32, %cst_41 {dimension_numbers = #tpu.dot_dimension_numbers<[1], [0], [0], [1], [0, 0, 1, 1], [], []>} : vector<64x72xf32>, vector<72x32xf32>, vector<64x32xf32> -> vector<64x32xf32>
    %c0_42 = arith.constant 0 : index
    %c0_43 = arith.constant 0 : index
    %34 = vector.load %arg5[%c0_42, %c0_43] : memref<1x32xf32, #tpu.memory_space<vmem>>, vector<1x32xf32>
    %35 = vector.broadcast %34 : vector<1x32xf32> to vector<64x32xf32>
    %36 = arith.addf %33, %35 : vector<64x32xf32>
    %37 = vector.extract_strided_slice %36 {offsets = [0, 0], sizes = [64, 16], strides = [1, 1]} : vector<64x32xf32> to vector<64x16xf32>
    %cst_44 = arith.constant 0.000000e+00 : f32
    %38 = vector.broadcast %cst_44 : f32 to vector<64x16xf32>
    %39 = arith.maximumf %37, %38 : vector<64x16xf32>
    %40 = vector.extract_strided_slice %36 {offsets = [0, 16], sizes = [64, 16], strides = [1, 1]} : vector<64x32xf32> to vector<64x16xf32>
    %41 = arith.addf %39, %40 : vector<64x16xf32>
    %42 = vector.shape_cast %41 : vector<64x16xf32> to vector<8x8x16xf32>
    %cst_45 = arith.constant 0.000000e+00 : f32
    %43 = vector.broadcast %cst_45 : f32 to vector<10x10x16xf32>
    %c0_46 = arith.constant 0 : index
    %c0_47 = arith.constant 0 : index
    %c0_48 = arith.constant 0 : index
    %44 = vector.load %arg14[%c0_46, %c0_47, %c0_48] : memref<10x10x16xf32, #tpu.memory_space<vmem>>, vector<10x10x16xf32>
    tpu.vector_store %arg14[%c0_46, %c0_47, %c0_48], %43 {strides = array<i32>} : memref<10x10x16xf32, #tpu.memory_space<vmem>>, vector<10x10x16xf32>,
    %c1_49 = arith.constant 1 : index
    %c1_50 = arith.constant 1 : index
    %c0_51 = arith.constant 0 : index
    %45 = vector.load %arg14[%c1_49, %c1_50, %c0_51] : memref<10x10x16xf32, #tpu.memory_space<vmem>>, vector<8x8x16xf32>
    tpu.vector_store %arg14[%c1_49, %c1_50, %c0_51], %42 {strides = array<i32>} : memref<10x10x16xf32, #tpu.memory_space<vmem>>, vector<8x8x16xf32>,
    %c0_52 = arith.constant 0 : index
    %c0_53 = arith.constant 0 : index
    %c0_54 = arith.constant 0 : index
    %46 = tpu.strided_load %arg14[%c0_52, %c0_53, %c0_54] {strides = array<i32: 2, 2, 1>} : memref<10x10x16xf32, #tpu.memory_space<vmem>>, vector<4x4x16xf32>
    %47 = vector.shape_cast %46 : vector<4x4x16xf32> to vector<16x16xf32>
    %c0_55 = arith.constant 0 : index
    %c1_56 = arith.constant 1 : index
    %c0_57 = arith.constant 0 : index
    %48 = tpu.strided_load %arg14[%c0_55, %c1_56, %c0_57] {strides = array<i32: 2, 2, 1>} : memref<10x10x16xf32, #tpu.memory_space<vmem>>, vector<4x4x16xf32>
    %49 = vector.shape_cast %48 : vector<4x4x16xf32> to vector<16x16xf32>
    %c0_58 = arith.constant 0 : index
    %c2_59 = arith.constant 2 : index
    %c0_60 = arith.constant 0 : index
    %50 = tpu.strided_load %arg14[%c0_58, %c2_59, %c0_60] {strides = array<i32: 2, 2, 1>} : memref<10x10x16xf32, #tpu.memory_space<vmem>>, vector<4x4x16xf32>
    %51 = vector.shape_cast %50 : vector<4x4x16xf32> to vector<16x16xf32>
    %c1_61 = arith.constant 1 : index
    %c0_62 = arith.constant 0 : index
    %c0_63 = arith.constant 0 : index
    %52 = tpu.strided_load %arg14[%c1_61, %c0_62, %c0_63] {strides = array<i32: 2, 2, 1>} : memref<10x10x16xf32, #tpu.memory_space<vmem>>, vector<4x4x16xf32>
    %53 = vector.shape_cast %52 : vector<4x4x16xf32> to vector<16x16xf32>
    %c1_64 = arith.constant 1 : index
    %c1_65 = arith.constant 1 : index
    %c0_66 = arith.constant 0 : index
    %54 = tpu.strided_load %arg14[%c1_64, %c1_65, %c0_66] {strides = array<i32: 2, 2, 1>} : memref<10x10x16xf32, #tpu.memory_space<vmem>>, vector<4x4x16xf32>
    %55 = vector.shape_cast %54 : vector<4x4x16xf32> to vector<16x16xf32>
    %c1_67 = arith.constant 1 : index
    %c2_68 = arith.constant 2 : index
    %c0_69 = arith.constant 0 : index
    %56 = tpu.strided_load %arg14[%c1_67, %c2_68, %c0_69] {strides = array<i32: 2, 2, 1>} : memref<10x10x16xf32, #tpu.memory_space<vmem>>, vector<4x4x16xf32>
    %57 = vector.shape_cast %56 : vector<4x4x16xf32> to vector<16x16xf32>
    %c2_70 = arith.constant 2 : index
    %c0_71 = arith.constant 0 : index
    %c0_72 = arith.constant 0 : index
    %58 = tpu.strided_load %arg14[%c2_70, %c0_71, %c0_72] {strides = array<i32: 2, 2, 1>} : memref<10x10x16xf32, #tpu.memory_space<vmem>>, vector<4x4x16xf32>
    %59 = vector.shape_cast %58 : vector<4x4x16xf32> to vector<16x16xf32>
    %c2_73 = arith.constant 2 : index
    %c1_74 = arith.constant 1 : index
    %c0_75 = arith.constant 0 : index
    %60 = tpu.strided_load %arg14[%c2_73, %c1_74, %c0_75] {strides = array<i32: 2, 2, 1>} : memref<10x10x16xf32, #tpu.memory_space<vmem>>, vector<4x4x16xf32>
    %61 = vector.shape_cast %60 : vector<4x4x16xf32> to vector<16x16xf32>
    %c2_76 = arith.constant 2 : index
    %c2_77 = arith.constant 2 : index
    %c0_78 = arith.constant 0 : index
    %62 = tpu.strided_load %arg14[%c2_76, %c2_77, %c0_78] {strides = array<i32: 2, 2, 1>} : memref<10x10x16xf32, #tpu.memory_space<vmem>>, vector<4x4x16xf32>
    %63 = vector.shape_cast %62 : vector<4x4x16xf32> to vector<16x16xf32>
    %64 = tpu.concatenate %47, %49, %51, %53, %55, %57, %59, %61, %63 in 1 : vector<16x16xf32>, vector<16x16xf32>, vector<16x16xf32>, vector<16x16xf32>, vector<16x16xf32>, vector<16x16xf32>, vector<16x16xf32>, vector<16x16xf32>, vector<16x16xf32> -> vector<16x144xf32>
    %c0_79 = arith.constant 0 : index
    %c0_80 = arith.constant 0 : index
    %65 = vector.load %arg6[%c0_79, %c0_80] : memref<144x64xf32, #tpu.memory_space<vmem>>, vector<144x64xf32>
    %cst_81 = arith.constant dense<0.000000e+00> : vector<16x64xf32>
    %66 = tpu.matmul %64, %65, %cst_81 {dimension_numbers = #tpu.dot_dimension_numbers<[1], [0], [0], [1], [0, 0, 1, 1], [], []>} : vector<16x144xf32>, vector<144x64xf32>, vector<16x64xf32> -> vector<16x64xf32>
    %c0_82 = arith.constant 0 : index
    %c0_83 = arith.constant 0 : index
    %67 = vector.load %arg7[%c0_82, %c0_83] : memref<1x64xf32, #tpu.memory_space<vmem>>, vector<1x64xf32>
    %68 = vector.broadcast %67 : vector<1x64xf32> to vector<16x64xf32>
    %69 = arith.addf %66, %68 : vector<16x64xf32>
    %70 = vector.extract_strided_slice %69 {offsets = [0, 0], sizes = [16, 32], strides = [1, 1]} : vector<16x64xf32> to vector<16x32xf32>
    %cst_84 = arith.constant 0.000000e+00 : f32
    %71 = vector.broadcast %cst_84 : f32 to vector<16x32xf32>
    %72 = arith.maximumf %70, %71 : vector<16x32xf32>
    %73 = vector.extract_strided_slice %69 {offsets = [0, 32], sizes = [16, 32], strides = [1, 1]} : vector<16x64xf32> to vector<16x32xf32>
    %74 = arith.addf %72, %73 : vector<16x32xf32>
    %75 = vector.shape_cast %74 : vector<16x32xf32> to vector<4x4x32xf32>
    %cst_85 = arith.constant 0.000000e+00 : f32
    %76 = vector.broadcast %cst_85 : f32 to vector<6x6x32xf32>
    %c0_86 = arith.constant 0 : index
    %c0_87 = arith.constant 0 : index
    %c0_88 = arith.constant 0 : index
    %77 = vector.load %arg15[%c0_86, %c0_87, %c0_88] : memref<6x6x32xf32, #tpu.memory_space<vmem>>, vector<6x6x32xf32>
    tpu.vector_store %arg15[%c0_86, %c0_87, %c0_88], %76 {strides = array<i32>} : memref<6x6x32xf32, #tpu.memory_space<vmem>>, vector<6x6x32xf32>,
    %c1_89 = arith.constant 1 : index
    %c1_90 = arith.constant 1 : index
    %c0_91 = arith.constant 0 : index
    %78 = vector.load %arg15[%c1_89, %c1_90, %c0_91] : memref<6x6x32xf32, #tpu.memory_space<vmem>>, vector<4x4x32xf32>
    tpu.vector_store %arg15[%c1_89, %c1_90, %c0_91], %75 {strides = array<i32>} : memref<6x6x32xf32, #tpu.memory_space<vmem>>, vector<4x4x32xf32>,
    %c0_92 = arith.constant 0 : index
    %c0_93 = arith.constant 0 : index
    %c0_94 = arith.constant 0 : index
    %79 = tpu.strided_load %arg15[%c0_92, %c0_93, %c0_94] {strides = array<i32: 2, 2, 1>} : memref<6x6x32xf32, #tpu.memory_space<vmem>>, vector<2x2x32xf32>
    %80 = vector.shape_cast %79 : vector<2x2x32xf32> to vector<4x32xf32>
    %c0_95 = arith.constant 0 : index
    %c1_96 = arith.constant 1 : index
    %c0_97 = arith.constant 0 : index
    %81 = tpu.strided_load %arg15[%c0_95, %c1_96, %c0_97] {strides = array<i32: 2, 2, 1>} : memref<6x6x32xf32, #tpu.memory_space<vmem>>, vector<2x2x32xf32>
    %82 = vector.shape_cast %81 : vector<2x2x32xf32> to vector<4x32xf32>
    %c0_98 = arith.constant 0 : index
    %c2_99 = arith.constant 2 : index
    %c0_100 = arith.constant 0 : index
    %83 = tpu.strided_load %arg15[%c0_98, %c2_99, %c0_100] {strides = array<i32: 2, 2, 1>} : memref<6x6x32xf32, #tpu.memory_space<vmem>>, vector<2x2x32xf32>
    %84 = vector.shape_cast %83 : vector<2x2x32xf32> to vector<4x32xf32>
    %c1_101 = arith.constant 1 : index
    %c0_102 = arith.constant 0 : index
    %c0_103 = arith.constant 0 : index
    %85 = tpu.strided_load %arg15[%c1_101, %c0_102, %c0_103] {strides = array<i32: 2, 2, 1>} : memref<6x6x32xf32, #tpu.memory_space<vmem>>, vector<2x2x32xf32>
    %86 = vector.shape_cast %85 : vector<2x2x32xf32> to vector<4x32xf32>
    %c1_104 = arith.constant 1 : index
    %c1_105 = arith.constant 1 : index
    %c0_106 = arith.constant 0 : index
    %87 = tpu.strided_load %arg15[%c1_104, %c1_105, %c0_106] {strides = array<i32: 2, 2, 1>} : memref<6x6x32xf32, #tpu.memory_space<vmem>>, vector<2x2x32xf32>
    %88 = vector.shape_cast %87 : vector<2x2x32xf32> to vector<4x32xf32>
    %c1_107 = arith.constant 1 : index
    %c2_108 = arith.constant 2 : index
    %c0_109 = arith.constant 0 : index
    %89 = tpu.strided_load %arg15[%c1_107, %c2_108, %c0_109] {strides = array<i32: 2, 2, 1>} : memref<6x6x32xf32, #tpu.memory_space<vmem>>, vector<2x2x32xf32>
    %90 = vector.shape_cast %89 : vector<2x2x32xf32> to vector<4x32xf32>
    %c2_110 = arith.constant 2 : index
    %c0_111 = arith.constant 0 : index
    %c0_112 = arith.constant 0 : index
    %91 = tpu.strided_load %arg15[%c2_110, %c0_111, %c0_112] {strides = array<i32: 2, 2, 1>} : memref<6x6x32xf32, #tpu.memory_space<vmem>>, vector<2x2x32xf32>
    %92 = vector.shape_cast %91 : vector<2x2x32xf32> to vector<4x32xf32>
    %c2_113 = arith.constant 2 : index
    %c1_114 = arith.constant 1 : index
    %c0_115 = arith.constant 0 : index
    %93 = tpu.strided_load %arg15[%c2_113, %c1_114, %c0_115] {strides = array<i32: 2, 2, 1>} : memref<6x6x32xf32, #tpu.memory_space<vmem>>, vector<2x2x32xf32>
    %94 = vector.shape_cast %93 : vector<2x2x32xf32> to vector<4x32xf32>
    %c2_116 = arith.constant 2 : index
    %c2_117 = arith.constant 2 : index
    %c0_118 = arith.constant 0 : index
    %95 = tpu.strided_load %arg15[%c2_116, %c2_117, %c0_118] {strides = array<i32: 2, 2, 1>} : memref<6x6x32xf32, #tpu.memory_space<vmem>>, vector<2x2x32xf32>
    %96 = vector.shape_cast %95 : vector<2x2x32xf32> to vector<4x32xf32>
    %97 = tpu.concatenate %80, %82, %84, %86, %88, %90, %92, %94, %96 in 1 : vector<4x32xf32>, vector<4x32xf32>, vector<4x32xf32>, vector<4x32xf32>, vector<4x32xf32>, vector<4x32xf32>, vector<4x32xf32>, vector<4x32xf32>, vector<4x32xf32> -> vector<4x288xf32>
    %c0_119 = arith.constant 0 : index
    %c0_120 = arith.constant 0 : index
    %98 = vector.load %arg8[%c0_119, %c0_120] : memref<288x128xf32, #tpu.memory_space<vmem>>, vector<288x128xf32>
    %cst_121 = arith.constant dense<0.000000e+00> : vector<4x128xf32>
    %99 = tpu.matmul %97, %98, %cst_121 {dimension_numbers = #tpu.dot_dimension_numbers<[1], [0], [0], [1], [0, 0, 1, 1], [], []>} : vector<4x288xf32>, vector<288x128xf32>, vector<4x128xf32> -> vector<4x128xf32>
    %c0_122 = arith.constant 0 : index
    %c0_123 = arith.constant 0 : index
    %100 = vector.load %arg9[%c0_122, %c0_123] : memref<1x128xf32, #tpu.memory_space<vmem>>, vector<1x128xf32>
    %101 = vector.broadcast %100 : vector<1x128xf32> to vector<4x128xf32>
    %102 = arith.addf %99, %101 : vector<4x128xf32>
    %103 = vector.extract_strided_slice %102 {offsets = [0, 0], sizes = [4, 64], strides = [1, 1]} : vector<4x128xf32> to vector<4x64xf32>
    %cst_124 = arith.constant 0.000000e+00 : f32
    %104 = vector.broadcast %cst_124 : f32 to vector<4x64xf32>
    %105 = arith.maximumf %103, %104 : vector<4x64xf32>
    %106 = vector.extract_strided_slice %102 {offsets = [0, 64], sizes = [4, 64], strides = [1, 1]} : vector<4x128xf32> to vector<4x64xf32>
    %107 = arith.addf %105, %106 : vector<4x64xf32>
    %108 = vector.shape_cast %107 : vector<4x64xf32> to vector<2x2x64xf32>
    %109 = vector.shape_cast %108 : vector<2x2x64xf32> to vector<4x64xf32>
    %cst_125 = arith.constant dense<0.000000e+00> : vector<64xf32>
    %110 = vector.multi_reduction <add>, %109, %cst_125 [0] : vector<4x64xf32> to vector<64xf32>
    %111 = vector.shape_cast %110 : vector<64xf32> to vector<1x64xf32>
    %cst_126 = arith.constant 4.000000e+00 : f32
    %112 = vector.broadcast %cst_126 : f32 to vector<1x64xf32>
    %113 = arith.divf %111, %112 : vector<1x64xf32>
    %c0_127 = arith.constant 0 : index
    %c0_128 = arith.constant 0 : index
    %114 = vector.load %arg10[%c0_127, %c0_128] : memref<64x6xf32, #tpu.memory_space<vmem>>, vector<64x6xf32>
    %cst_129 = arith.constant dense<0.000000e+00> : vector<1x6xf32>
    %115 = tpu.matmul %113, %114, %cst_129 {dimension_numbers = #tpu.dot_dimension_numbers<[1], [0], [0], [1], [0, 0, 1, 1], [], []>} : vector<1x64xf32>, vector<64x6xf32>, vector<1x6xf32> -> vector<1x6xf32>
    %c0_130 = arith.constant 0 : index
    %c0_131 = arith.constant 0 : index
    %116 = vector.load %arg11[%c0_130, %c0_131] : memref<1x6xf32, #tpu.memory_space<vmem>>, vector<1x6xf32>
    %117 = arith.addf %115, %116 : vector<1x6xf32>
    %118 = vector.shape_cast %117 : vector<1x6xf32> to vector<1x1x6xf32>
    %c0_132 = arith.constant 0 : index
    %c0_133 = arith.constant 0 : index
    %c0_134 = arith.constant 0 : index
    %119 = vector.load %arg12[%c0_132, %c0_133, %c0_134] : memref<1x1x6xf32, #tpu.memory_space<vmem>>, vector<1x1x6xf32>
    tpu.vector_store %arg12[%c0_132, %c0_133, %c0_134], %118 {strides = array<i32>} : memref<1x1x6xf32, #tpu.memory_space<vmem>>, vector<1x1x6xf32>,
    return
  }
  func.func @transform_0(%arg0: i32) -> (i32, i32, i32) {
    %c0_i32 = arith.constant 0 : i32
    %c0_i32_0 = arith.constant 0 : i32
    %c0_i32_1 = arith.constant 0 : i32
    return %arg0, %c0_i32, %c0_i32_0 : i32, i32, i32
  }
  func.func @transform_1(%arg0: i32) -> (i32, i32) {
    %c0_i32 = arith.constant 0 : i32
    %c0_i32_0 = arith.constant 0 : i32
    %c0_i32_1 = arith.constant 0 : i32
    return %c0_i32, %c0_i32_0 : i32, i32
  }
  func.func @transform_2(%arg0: i32) -> (i32, i32) {
    %c0_i32 = arith.constant 0 : i32
    %c0_i32_0 = arith.constant 0 : i32
    %c0_i32_1 = arith.constant 0 : i32
    return %c0_i32, %c0_i32_0 : i32, i32
  }
  func.func @transform_3(%arg0: i32) -> (i32, i32) {
    %c0_i32 = arith.constant 0 : i32
    %c0_i32_0 = arith.constant 0 : i32
    %c0_i32_1 = arith.constant 0 : i32
    return %c0_i32, %c0_i32_0 : i32, i32
  }
  func.func @transform_4(%arg0: i32) -> (i32, i32) {
    %c0_i32 = arith.constant 0 : i32
    %c0_i32_0 = arith.constant 0 : i32
    %c0_i32_1 = arith.constant 0 : i32
    return %c0_i32, %c0_i32_0 : i32, i32
  }
  func.func @transform_5(%arg0: i32) -> (i32, i32) {
    %c0_i32 = arith.constant 0 : i32
    %c0_i32_0 = arith.constant 0 : i32
    %c0_i32_1 = arith.constant 0 : i32
    return %c0_i32, %c0_i32_0 : i32, i32
  }
  func.func @transform_6(%arg0: i32) -> (i32, i32) {
    %c0_i32 = arith.constant 0 : i32
    %c0_i32_0 = arith.constant 0 : i32
    %c0_i32_1 = arith.constant 0 : i32
    return %c0_i32, %c0_i32_0 : i32, i32
  }
  func.func @transform_7(%arg0: i32) -> (i32, i32) {
    %c0_i32 = arith.constant 0 : i32
    %c0_i32_0 = arith.constant 0 : i32
    %c0_i32_1 = arith.constant 0 : i32
    return %c0_i32, %c0_i32_0 : i32, i32
  }
  func.func @transform_8(%arg0: i32) -> (i32, i32) {
    %c0_i32 = arith.constant 0 : i32
    %c0_i32_0 = arith.constant 0 : i32
    %c0_i32_1 = arith.constant 0 : i32
    return %c0_i32, %c0_i32_0 : i32, i32
  }
  func.func @transform_9(%arg0: i32) -> (i32, i32) {
    %c0_i32 = arith.constant 0 : i32
    %c0_i32_0 = arith.constant 0 : i32
    %c0_i32_1 = arith.constant 0 : i32
    return %c0_i32, %c0_i32_0 : i32, i32
  }
  func.func @transform_10(%arg0: i32) -> (i32, i32) {
    %c0_i32 = arith.constant 0 : i32
    %c0_i32_0 = arith.constant 0 : i32
    %c0_i32_1 = arith.constant 0 : i32
    return %c0_i32, %c0_i32_0 : i32, i32
  }
  func.func @transform_11(%arg0: i32) -> (i32, i32, i32) {
    %c0_i32 = arith.constant 0 : i32
    %c0_i32_0 = arith.constant 0 : i32
    %c0_i32_1 = arith.constant 0 : i32
    return %arg0, %c0_i32, %c0_i32_0 : i32, i32, i32
  }
}

</mosaic_0001>

<llo_original>
// kernel: classifier_forward.1
$region0: #{classifier_forward.1}
  #allocation0 [shape = 'u32[]', space=smem, size = 0x4, offset = 0x4, fixed_abs, tag = 'smem constant byte address 0x4 - core index']
  #allocation1 [shape = 'u32[72,128]{1,0:T(1,128)}', space=vmem, size = 0x9000, scoped, tag = 'internal scratch']
  #allocation2 [shape = 'f32[18,18,8]{2,1,0:T(8,128)}', space=vmem, size = 0x36000, scoped, tag = 'scratch operand']
  #allocation3 [shape = 'f32[10,10,16]{2,1,0:T(8,128)}', space=vmem, size = 0x14000, scoped, tag = 'scratch operand']
  #allocation4 [shape = 'f32[6,6,32]{2,1,0:T(8,128)}', space=vmem, size = 0x6000, scoped, tag = 'scratch operand']
  %s0 = inlined_call_operand.vmem [shape: f32[2,256,363], index: 0, kind: input, shape index: {}]
  %s1 = inlined_call_operand.vmem [shape: f32[363,8], index: 1, kind: input, shape index: {}]
  %s2 = inlined_call_operand.vmem [shape: f32[1,8], index: 2, kind: input, shape index: {}]
  %s3 = inlined_call_operand.vmem [shape: f32[72,32], index: 3, kind: input, shape index: {}]
  %s4 = inlined_call_operand.vmem [shape: f32[1,32], index: 4, kind: input, shape index: {}]
  %s5 = inlined_call_operand.vmem [shape: f32[144,64], index: 5, kind: input, shape index: {}]
  %s6 = inlined_call_operand.vmem [shape: f32[1,64], index: 6, kind: input, shape index: {}]
  %s7 = inlined_call_operand.vmem [shape: f32[288,128], index: 7, kind: input, shape index: {}]
  %s8 = inlined_call_operand.vmem [shape: f32[1,128], index: 8, kind: input, shape index: {}]
  %s9 = inlined_call_operand.vmem [shape: f32[64,6], index: 9, kind: input, shape index: {}]
  %s10 = inlined_call_operand.vmem [shape: f32[1,6], index: 10, kind: input, shape index: {}]
  %s11 = inlined_call_operand.hbm [shape: f32[2,1,6], index: 11, kind: output, shape index: {}]
  %s12 = sld [smem:[#allocation0]]
  $region77: #{classifier_forward.1} parent=0
    _
  %s14 = ssub.s32 1, %s12
  %s15 = scalar_select 0, %s14, %s12
  $region1: #{classifier_forward.1} parent=0
    #allocation5 [shape = 'u8[1024]{0}', space=vmem, size = 0x400, scoped, tag = 'output window, operand 0']
    #allocation6 [shape = 's32[2]{0}', space=sflag, size = 0x8, scoped, tag = 'scoped memory for classifier_forward.1']
    %16 = vsyncpa [#allocation6], 0
    %s17 = scalar_lea.sflag [#allocation6], 1
    %18 = vsyncpa %s17, 0
    loop: start=0, step=1, limit=4
    $region2: #{classifier_forward.1} parent=1 // loop_pre_header
      _
    $region3: #{classifier_forward.1} parent=1 // loop_header
      %s20 = sphi 0, %s24
      %p21 = scmp.ge.s32.totalorder %s20, 4
      %s30 = sphi 0, %s32
      %s33 = sphi 0, %s30
      %s34 = sphi 0, %s33
      %s50 = sphi 0, %s34
      %s54 = sphi 0, %s54
      %s56 = sphi 0, %s54
      %s57 = sphi 0, %s56
      %s71 = sphi 0, %s57
      %s75 = sphi 0, %s75
      %s77 = sphi 0, %s75
      %s78 = sphi 0, %s77
      %s92 = sphi 0, %s78
      %s96 = sphi 0, %s96
      %s98 = sphi 0, %s96
      %s99 = sphi 0, %s98
      %s113 = sphi 0, %s99
      %s117 = sphi 0, %s117
      %s119 = sphi 0, %s117
      %s120 = sphi 0, %s119
      %s134 = sphi 0, %s120
      %s138 = sphi 0, %s138
      %s140 = sphi 0, %s138
      %s141 = sphi 0, %s140
      %s155 = sphi 0, %s141
      %s159 = sphi 0, %s159
      %s161 = sphi 0, %s159
      %s162 = sphi 0, %s161
      %s176 = sphi 0, %s162
      %s180 = sphi 0, %s180
      %s182 = sphi 0, %s180
      %s183 = sphi 0, %s182
      %s197 = sphi 0, %s183
      %s201 = sphi 0, %s201
      %s203 = sphi 0, %s201
      %s204 = sphi 0, %s203
      %s218 = sphi 0, %s204
      %s222 = sphi 0, %s222
      %s224 = sphi 0, %s222
      %s225 = sphi 0, %s224
      %s239 = sphi 0, %s225
      %s243 = sphi 0, %s243
      %s245 = sphi 0, %s243
      %s246 = sphi 0, %s245
      %s260 = sphi 0, %s246
      %s266 = sphi 0, %s268
      %s269 = sphi 0, %s266
      %s270 = sphi 0, %s269
      %s286 = sphi 0, %s270
    $region4: #{classifier_forward.1} parent=1 // loop_header_branch
      %23 = sbr.rel (%p21) target = $region8
    $region5: #{classifier_forward.1} parent=1 // loop_body
      %s25 = ssub.s32 %s20, 1
      %s26 = ssub.s32 %s20, 2
      %s27 = sadd.s32 %s20, 1
      %s28 = ssub.s32 %s20, %s27
      %p29 = scmp.eq.s32.totalorder %s28, 0
      %s31 = sadd.s32 %s30, 1
      %s32 = scalar_select %p29, %s30, %s31
      %p35 = pneg %p29
      %p36 = scmp.eq.s32.totalorder %s20, 1
      %p37 = por %p35, %p36
      %p38 = scmp.ne.s32.totalorder %s30, %s33
      %p39 = scmp.eq.s32.totalorder %s20, 0
      %p40 = por %p38, %p39
      %p41 = scmp.ne.s32.totalorder %s30, %s33
      %p42 = scmp.eq.s32.totalorder %s25, 1
      %p43 = por %p41, %p42
      %p44 = scmp.ne.s32.totalorder %s33, %s34
      %p45 = scmp.eq.s32.totalorder %s25, 0
      %p46 = por %p44, %p45
      %p47 = scmp.ne.s32.totalorder %s33, %s34
      %p48 = scmp.eq.s32.totalorder %s26, 1
      %p49 = por %p47, %p48
      %p51 = scmp.ne.s32.totalorder %s34, %s50
      %p52 = scmp.eq.s32.totalorder %s26, 0
      %p53 = por %p51, %p52
      %s55 = sadd.s32 %s54, 1
      %p58 = scmp.eq.s32.totalorder %s20, 1
      %p59 = scmp.ne.s32.totalorder %s54, %s56
      %p60 = scmp.eq.s32.totalorder %s20, 0
      %p61 = por %p59, %p60
      %p62 = scmp.ne.s32.totalorder %s54, %s56
      %p63 = scmp.eq.s32.totalorder %s25, 1
      %p64 = por %p62, %p63
      %p65 = scmp.ne.s32.totalorder %s56, %s57
      %p66 = scmp.eq.s32.totalorder %s25, 0
      %p67 = por %p65, %p66
      %p68 = scmp.ne.s32.totalorder %s56, %s57
      %p69 = scmp.eq.s32.totalorder %s26, 1
      %p70 = por %p68, %p69
      %p72 = scmp.ne.s32.totalorder %s57, %s71
      %p73 = scmp.eq.s32.totalorder %s26, 0
      %p74 = por %p72, %p73
      %s76 = sadd.s32 %s75, 1
      %p79 = scmp.eq.s32.totalorder %s20, 1
      %p80 = scmp.ne.s32.totalorder %s75, %s77
      %p81 = scmp.eq.s32.totalorder %s20, 0
      %p82 = por %p80, %p81
      %p83 = scmp.ne.s32.totalorder %s75, %s77
      %p84 = scmp.eq.s32.totalorder %s25, 1
      %p85 = por %p83, %p84
      %p86 = scmp.ne.s32.totalorder %s77, %s78
      %p87 = scmp.eq.s32.totalorder %s25, 0
      %p88 = por %p86, %p87
      %p89 = scmp.ne.s32.totalorder %s77, %s78
      %p90 = scmp.eq.s32.totalorder %s26, 1
      %p91 = por %p89, %p90
      %p93 = scmp.ne.s32.totalorder %s78, %s92
      %p94 = scmp.eq.s32.totalorder %s26, 0
      %p95 = por %p93, %p94
      %s97 = sadd.s32 %s96, 1
      %p100 = scmp.eq.s32.totalorder %s20, 1
      %p101 = scmp.ne.s32.totalorder %s96, %s98
      %p102 = scmp.eq.s32.totalorder %s20, 0
      %p103 = por %p101, %p102
      %p104 = scmp.ne.s32.totalorder %s96, %s98
      %p105 = scmp.eq.s32.totalorder %s25, 1
      %p106 = por %p104, %p105
      %p107 = scmp.ne.s32.totalorder %s98, %s99
      %p108 = scmp.eq.s32.totalorder %s25, 0
      %p109 = por %p107, %p108
      %p110 = scmp.ne.s32.totalorder %s98, %s99
      %p111 = scmp.eq.s32.totalorder %s26, 1
      %p112 = por %p110, %p111
      %p114 = scmp.ne.s32.totalorder %s99, %s113
      %p115 = scmp.eq.s32.totalorder %s26, 0
      %p116 = por %p114, %p115
      %s118 = sadd.s32 %s117, 1
      %p121 = scmp.eq.s32.totalorder %s20, 1
      %p122 = scmp.ne.s32.totalorder %s117, %s119
      %p123 = scmp.eq.s32.totalorder %s20, 0
      %p124 = por %p122, %p123
      %p125 = scmp.ne.s32.totalorder %s117, %s119
      %p126 = scmp.eq.s32.totalorder %s25, 1
      %p127 = por %p125, %p126
      %p128 = scmp.ne.s32.totalorder %s119, %s120
      %p129 = scmp.eq.s32.totalorder %s25, 0
      %p130 = por %p128, %p129
      %p131 = scmp.ne.s32.totalorder %s119, %s120
      %p132 = scmp.eq.s32.totalorder %s26, 1
      %p133 = por %p131, %p132
      %p135 = scmp.ne.s32.totalorder %s120, %s134
      %p136 = scmp.eq.s32.totalorder %s26, 0
      %p137 = por %p135, %p136
      %s139 = sadd.s32 %s138, 1
      %p142 = scmp.eq.s32.totalorder %s20, 1
      %p143 = scmp.ne.s32.totalorder %s138, %s140
      %p144 = scmp.eq.s32.totalorder %s20, 0
      %p145 = por %p143, %p144
      %p146 = scmp.ne.s32.totalorder %s138, %s140
      %p147 = scmp.eq.s32.totalorder %s25, 1
      %p148 = por %p146, %p147
      %p149 = scmp.ne.s32.totalorder %s140, %s141
      %p150 = scmp.eq.s32.totalorder %s25, 0
      %p151 = por %p149, %p150
      %p152 = scmp.ne.s32.totalorder %s140, %s141
      %p153 = scmp.eq.s32.totalorder %s26, 1
      %p154 = por %p152, %p153
      %p156 = scmp.ne.s32.totalorder %s141, %s155
      %p157 = scmp.eq.s32.totalorder %s26, 0
      %p158 = por %p156, %p157
      %s160 = sadd.s32 %s159, 1
      %p163 = scmp.eq.s32.totalorder %s20, 1
      %p164 = scmp.ne.s32.totalorder %s159, %s161
      %p165 = scmp.eq.s32.totalorder %s20, 0
      %p166 = por %p164, %p165
      %p167 = scmp.ne.s32.totalorder %s159, %s161
      %p168 = scmp.eq.s32.totalorder %s25, 1
      %p169 = por %p167, %p168
      %p170 = scmp.ne.s32.totalorder %s161, %s162
      %p171 = scmp.eq.s32.totalorder %s25, 0
      %p172 = por %p170, %p171
      %p173 = scmp.ne.s32.totalorder %s161, %s162
      %p174 = scmp.eq.s32.totalorder %s26, 1
      %p175 = por %p173, %p174
      %p177 = scmp.ne.s32.totalorder %s162, %s176
      %p178 = scmp.eq.s32.totalorder %s26, 0
      %p179 = por %p177, %p178
      %s181 = sadd.s32 %s180, 1
      %p184 = scmp.eq.s32.totalorder %s20, 1
      %p185 = scmp.ne.s32.totalorder %s180, %s182
      %p186 = scmp.eq.s32.totalorder %s20, 0
      %p187 = por %p185, %p186
      %p188 = scmp.ne.s32.totalorder %s180, %s182
      %p189 = scmp.eq.s32.totalorder %s25, 1
      %p190 = por %p188, %p189
      %p191 = scmp.ne.s32.totalorder %s182, %s183
      %p192 = scmp.eq.s32.totalorder %s25, 0
      %p193 = por %p191, %p192
      %p194 = scmp.ne.s32.totalorder %s182, %s183
      %p195 = scmp.eq.s32.totalorder %s26, 1
      %p196 = por %p194, %p195
      %p198 = scmp.ne.s32.totalorder %s183, %s197
      %p199 = scmp.eq.s32.totalorder %s26, 0
      %p200 = por %p198, %p199
      %s202 = sadd.s32 %s201, 1
      %p205 = scmp.eq.s32.totalorder %s20, 1
      %p206 = scmp.ne.s32.totalorder %s201, %s203
      %p207 = scmp.eq.s32.totalorder %s20, 0
      %p208 = por %p206, %p207
      %p209 = scmp.ne.s32.totalorder %s201, %s203
      %p210 = scmp.eq.s32.totalorder %s25, 1
      %p211 = por %p209, %p210
      %p212 = scmp.ne.s32.totalorder %s203, %s204
      %p213 = scmp.eq.s32.totalorder %s25, 0
      %p214 = por %p212, %p213
      %p215 = scmp.ne.s32.totalorder %s203, %s204
      %p216 = scmp.eq.s32.totalorder %s26, 1
      %p217 = por %p215, %p216
      %p219 = scmp.ne.s32.totalorder %s204, %s218
      %p220 = scmp.eq.s32.totalorder %s26, 0
      %p221 = por %p219, %p220
      %s223 = sadd.s32 %s222, 1
      %p226 = scmp.eq.s32.totalorder %s20, 1
      %p227 = scmp.ne.s32.totalorder %s222, %s224
      %p228 = scmp.eq.s32.totalorder %s20, 0
      %p229 = por %p227, %p228
      %p230 = scmp.ne.s32.totalorder %s222, %s224
      %p231 = scmp.eq.s32.totalorder %s25, 1
      %p232 = por %p230, %p231
      %p233 = scmp.ne.s32.totalorder %s224, %s225
      %p234 = scmp.eq.s32.totalorder %s25, 0
      %p235 = por %p233, %p234
      %p236 = scmp.ne.s32.totalorder %s224, %s225
      %p237 = scmp.eq.s32.totalorder %s26, 1
      %p238 = por %p236, %p237
      %p240 = scmp.ne.s32.totalorder %s225, %s239
      %p241 = scmp.eq.s32.totalorder %s26, 0
      %p242 = por %p240, %p241
      %s244 = sadd.s32 %s243, 1
      %p247 = scmp.eq.s32.totalorder %s20, 1
      %p248 = scmp.ne.s32.totalorder %s243, %s245
      %p249 = scmp.eq.s32.totalorder %s20, 0
      %p250 = por %p248, %p249
      %p251 = scmp.ne.s32.totalorder %s243, %s245
      %p252 = scmp.eq.s32.totalorder %s25, 1
      %p253 = por %p251, %p252
      %p254 = scmp.ne.s32.totalorder %s245, %s246
      %p255 = scmp.eq.s32.totalorder %s25, 0
      %p256 = por %p254, %p255
      %p257 = scmp.ne.s32.totalorder %s245, %s246
      %p258 = scmp.eq.s32.totalorder %s26, 1
      %p259 = por %p257, %p258
      %p261 = scmp.ne.s32.totalorder %s246, %s260
      %p262 = scmp.eq.s32.totalorder %s26, 0
      %p263 = por %p261, %p262
      %s264 = ssub.s32 %s20, %s27
      %p265 = scmp.eq.s32.totalorder %s264, 0
      %s267 = sadd.s32 %s266, 1
      %s268 = scalar_select %p265, %s266, %s267
      %p271 = pneg %p265
      %p272 = scmp.eq.s32.totalorder %s20, 1
      %p273 = por %p271, %p272
      %p274 = scmp.ne.s32.totalorder %s266, %s269
      %p275 = scmp.eq.s32.totalorder %s20, 0
      %p276 = por %p274, %p275
      %p277 = scmp.ne.s32.totalorder %s266, %s269
      %p278 = scmp.eq.s32.totalorder %s25, 1
      %p279 = por %p277, %p278
      %p280 = scmp.ne.s32.totalorder %s269, %s270
      %p281 = scmp.eq.s32.totalorder %s25, 0
      %p282 = por %p280, %p281
      %p283 = scmp.ne.s32.totalorder %s269, %s270
      %p284 = scmp.eq.s32.totalorder %s26, 1
      %p285 = por %p283, %p284
      %p287 = scmp.ne.s32.totalorder %s270, %s286
      %p288 = scmp.eq.s32.totalorder %s26, 0
      %p289 = por %p287, %p288
      %p290 = scmp.le.s32.totalorder 1, %s20
      %p291 = scmp.lt.s32.totalorder %s20, 3
      %p292 = pnand %p290, %p291
      %p293 = pneg %p292
      // Predicated region
      $region9: #{classifier_forward.1} parent=5 // pred_check
        _
      $region10: #{classifier_forward.1} parent=5 // pred_check_branch
        %295 = sbr.rel (%p292) target = $region12
      $region11: #{classifier_forward.1} parent=5 // pred_region
        %s296 = ssub.s32 %s20, 1
        // Predicated region
        $region13: #{classifier_forward.1} parent=11 // pred_check
          %p297 = pneg %p67
        $region14: #{classifier_forward.1} parent=11 // pred_check_branch
          %299 = sbr.rel (%p297) target = $region16
        $region15: #{classifier_forward.1} parent=11 // pred_region
          _
        $region16: #{classifier_forward.1} parent=11 // pred_fallthru
          _
        // Predicated region
        $region17: #{classifier_forward.1} parent=11 // pred_check
          %p300 = pneg %p88
        $region18: #{classifier_forward.1} parent=11 // pred_check_branch
          %302 = sbr.rel (%p300) target = $region20
        $region19: #{classifier_forward.1} parent=11 // pred_region
          _
        $region20: #{classifier_forward.1} parent=11 // pred_fallthru
          _
        // Predicated region
        $region21: #{classifier_forward.1} parent=11 // pred_check
          %p303 = pneg %p109
        $region22: #{classifier_forward.1} parent=11 // pred_check_branch
          %305 = sbr.rel (%p303) target = $region24
        $region23: #{classifier_forward.1} parent=11 // pred_region
          _
        $region24: #{classifier_forward.1} parent=11 // pred_fallthru
          _
        // Predicated region
        $region25: #{classifier_forward.1} parent=11 // pred_check
          %p306 = pneg %p130
        $region26: #{classifier_forward.1} parent=11 // pred_check_branch
          %308 = sbr.rel (%p306) target = $region28
        $region27: #{classifier_forward.1} parent=11 // pred_region
          _
        $region28: #{classifier_forward.1} parent=11 // pred_fallthru
          _
        // Predicated region
        $region29: #{classifier_forward.1} parent=11 // pred_check
          %p309 = pneg %p151
        $region30: #{classifier_forward.1} parent=11 // pred_check_branch
          %311 = sbr.rel (%p309) target = $region32
        $region31: #{classifier_forward.1} parent=11 // pred_region
          _
        $region32: #{classifier_forward.1} parent=11 // pred_fallthru
          _
        // Predicated region
        $region33: #{classifier_forward.1} parent=11 // pred_check
          %p312 = pneg %p172
        $region34: #{classifier_forward.1} parent=11 // pred_check_branch
          %314 = sbr.rel (%p312) target = $region36
        $region35: #{classifier_forward.1} parent=11 // pred_region
          _
        $region36: #{classifier_forward.1} parent=11 // pred_fallthru
          _
        // Predicated region
        $region37: #{classifier_forward.1} parent=11 // pred_check
          %p315 = pneg %p193
        $region38: #{classifier_forward.1} parent=11 // pred_check_branch
          %317 = sbr.rel (%p315) target = $region40
        $region39: #{classifier_forward.1} parent=11 // pred_region
          _
        $region40: #{classifier_forward.1} parent=11 // pred_fallthru
          _
        // Predicated region
        $region41: #{classifier_forward.1} parent=11 // pred_check
          %p318 = pneg %p214
        $region42: #{classifier_forward.1} parent=11 // pred_check_branch
          %320 = sbr.rel (%p318) target = $region44
        $region43: #{classifier_forward.1} parent=11 // pred_region
          _
        $region44: #{classifier_forward.1} parent=11 // pred_fallthru
          _
        // Predicated region
        $region45: #{classifier_forward.1} parent=11 // pred_check
          %p321 = pneg %p235
        $region46: #{classifier_forward.1} parent=11 // pred_check_branch
          %323 = sbr.rel (%p321) target = $region48
        $region47: #{classifier_forward.1} parent=11 // pred_region
          _
        $region48: #{classifier_forward.1} parent=11 // pred_fallthru
          _
        // Predicated region
        $region49: #{classifier_forward.1} parent=11 // pred_check
          %p324 = pneg %p256
        $region50: #{classifier_forward.1} parent=11 // pred_check_branch
          %326 = sbr.rel (%p324) target = $region52
        $region51: #{classifier_forward.1} parent=11 // pred_region
          _
        $region52: #{classifier_forward.1} parent=11 // pred_fallthru
          _
      $region12: #{classifier_forward.1} parent=5 // pred_fallthru
        _
      %p327 = scmp.lt.s32.totalorder %s20, 2
      // Predicated region
      $region53: #{classifier_forward.1} parent=5 // pred_check
        %p328 = pneg %p327
      $region54: #{classifier_forward.1} parent=5 // pred_check_branch
        %330 = sbr.rel (%p328) target = $region56
      $region55: #{classifier_forward.1} parent=5 // pred_region
        // Predicated region
        $region57: #{classifier_forward.1} parent=55 // pred_check
          %p331 = pneg %p40
        $region58: #{classifier_forward.1} parent=55 // pred_check_branch
          %333 = sbr.rel (%p331) target = $region60
        $region59: #{classifier_forward.1} parent=55 // pred_region
          %p334 = scmp.lt.s32.totalorder %s20, 1
          %s335 = scalar_select %p334, %s20, 1
          %s336 = smul.addr %s335, 96
          %s337 = smul.addr %s336, 8
          %s338 = scalar_lea.vmem %s0, %s337
        $region60: #{classifier_forward.1} parent=55 // pred_fallthru
          _
      $region56: #{classifier_forward.1} parent=5 // pred_fallthru
        _
      %p339 = scmp.le.s32.totalorder 1, %s20
      %p340 = scmp.lt.s32.totalorder %s20, 3
      %p341 = pnand %p339, %p340
      %p342 = pneg %p341
      // Predicated region
      $region61: #{classifier_forward.1} parent=5 // pred_check
        _
      $region62: #{classifier_forward.1} parent=5 // pred_check_branch
        %344 = sbr.rel (%p341) target = $region64
      $region63: #{classifier_forward.1} parent=5 // pred_region
        %s345 = ssub.s32 %s20, 1
        %p346 = scmp.lt.s32.totalorder %s25, 1
        %s347 = scalar_select %p346, %s25, 1
        %s348 = smul.addr %s347, 96
        %s349 = smul.addr %s348, 8
        %s350 = scalar_lea.vmem %s0, %s349
        %p351 = pneg %p46
        %p352 = pneg %p43
        %p353 = pneg %p67
        %p354 = pneg %p64
        %p355 = pneg %p88
        %p356 = pneg %p85
        %p357 = pneg %p109
        %p358 = pneg %p106
        %p359 = pneg %p130
        %p360 = pneg %p127
        %p361 = pneg %p151
        %p362 = pneg %p148
        %p363 = pneg %p172
        %p364 = pneg %p169
        %p365 = pneg %p193
        %p366 = pneg %p190
        %p367 = pneg %p214
        %p368 = pneg %p211
        %p369 = pneg %p235
        %p370 = pneg %p232
        %p371 = pneg %p256
        %p372 = pneg %p253
        %p373 = pneg %p282
        %p374 = pneg %p279
        %s375 = sand.u32 %s269, 1
        %s376 = scalar_lea.sflag [#allocation6], %s375
        %s377 = sand.u32 %s269, 1
        %s378 = scalar_lea.vmem [#allocation5], %s377
        %p379 = scmp.lt.s32.totalorder %s25, 1
        %s380 = scalar_select %p379, %s25, 1
        %s381 = smul.addr %s380, 96
        %s382 = smul.addr %s381, 8
        %s383 = scalar_lea.vmem %s0, %s382
        %v384 = vld [vmem:[%s383] sm:$0xff]
        %v385 = vld [vmem:[%s383 + $0x8] sm:$0xff]
        %v386 = vld [vmem:[%s383 + $0x10] sm:$0xff]
        %v387 = vld [vmem:[%s383 + $0x18] sm:$0xff]
        %v388 = vld [vmem:[%s383 + $0x20] sm:$0xff]
        %v389 = vld [vmem:[%s383 + $0x28] sm:$0xff]
        %v390 = vld [vmem:[%s383 + $0x30] sm:$0xff]
        %v391 = vld [vmem:[%s383 + $0x38] sm:$0xff]
        %v392 = vld [vmem:[%s383 + $0x40] sm:$0xff]
        %v393 = vld [vmem:[%s383 + $0x48] sm:$0xff]
        %v394 = vld [vmem:[%s383 + $0x50] sm:$0xff]
        %v395 = vld [vmem:[%s383 + $0x58] sm:$0xff]
        %v396 = vld [vmem:[%s383 + $0x60] sm:$0xff]
        %v397 = vld [vmem:[%s383 + $0x68] sm:$0xff]
        %v398 = vld [vmem:[%s383 + $0x70] sm:$0xff]
        %v399 = vld [vmem:[%s383 + $0x78] sm:$0xff]
        %v400 = vld [vmem:[%s383 + $0x80] sm:$0xff]
        %v401 = vld [vmem:[%s383 + $0x88] sm:$0xff]
        %v402 = vld [vmem:[%s383 + $0x90] sm:$0xff]
        %v403 = vld [vmem:[%s383 + $0x98] sm:$0xff]
        %v404 = vld [vmem:[%s383 + $0xa0] sm:$0xff]
        %v405 = vld [vmem:[%s383 + $0xa8] sm:$0xff]
        %v406 = vld [vmem:[%s383 + $0xb0] sm:$0xff]
        %v407 = vld [vmem:[%s383 + $0xb8] sm:$0xff]
        %v408 = vld [vmem:[%s383 + $0xc0] sm:$0xff]
        %v409 = vld [vmem:[%s383 + $0xc8] sm:$0xff]
        %v410 = vld [vmem:[%s383 + $0xd0] sm:$0xff]
        %v411 = vld [vmem:[%s383 + $0xd8] sm:$0xff]
        %v412 = vld [vmem:[%s383 + $0xe0] sm:$0xff]
        %v413 = vld [vmem:[%s383 + $0xe8] sm:$0xff]
        %v414 = vld [vmem:[%s383 + $0xf0] sm:$0xff]
        %v415 = vld [vmem:[%s383 + $0xf8] sm:$0xff]
        %v416 = vld [vmem:[%s383 + $0x100] sm:$0xff]
        %v417 = vld [vmem:[%s383 + $0x108] sm:$0xff]
        %v418 = vld [vmem:[%s383 + $0x110] sm:$0xff]
        %v419 = vld [vmem:[%s383 + $0x118] sm:$0xff]
        %v420 = vld [vmem:[%s383 + $0x120] sm:$0xff]
        %v421 = vld [vmem:[%s383 + $0x128] sm:$0xff]
        %v422 = vld [vmem:[%s383 + $0x130] sm:$0xff]
        %v423 = vld [vmem:[%s383 + $0x138] sm:$0xff]
        %v424 = vld [vmem:[%s383 + $0x140] sm:$0xff]
        %v425 = vld [vmem:[%s383 + $0x148] sm:$0xff]
        %v426 = vld [vmem:[%s383 + $0x150] sm:$0xff]
        %v427 = vld [vmem:[%s383 + $0x158] sm:$0xff]
        %v428 = vld [vmem:[%s383 + $0x160] sm:$0xff]
        %v429 = vld [vmem:[%s383 + $0x168] sm:$0xff]
        %v430 = vld [vmem:[%s383 + $0x170] sm:$0xff]
        %v431 = vld [vmem:[%s383 + $0x178] sm:$0xff]
        %v432 = vld [vmem:[%s383 + $0x180] sm:$0xff]
        %v433 = vld [vmem:[%s383 + $0x188] sm:$0xff]
        %v434 = vld [vmem:[%s383 + $0x190] sm:$0xff]
        %v435 = vld [vmem:[%s383 + $0x198] sm:$0xff]
        %v436 = vld [vmem:[%s383 + $0x1a0] sm:$0xff]
        %v437 = vld [vmem:[%s383 + $0x1a8] sm:$0xff]
        %v438 = vld [vmem:[%s383 + $0x1b0] sm:$0xff]
        %v439 = vld [vmem:[%s383 + $0x1b8] sm:$0xff]
        %v440 = vld [vmem:[%s383 + $0x1c0] sm:$0xff]
        %v441 = vld [vmem:[%s383 + $0x1c8] sm:$0xff]
        %v442 = vld [vmem:[%s383 + $0x1d0] sm:$0xff]
        %v443 = vld [vmem:[%s383 + $0x1d8] sm:$0xff]
        %v444 = vld [vmem:[%s383 + $0x1e0] sm:$0xff]
        %v445 = vld [vmem:[%s383 + $0x1e8] sm:$0xff]
        %v446 = vld [vmem:[%s383 + $0x1f0] sm:$0xff]
        %v447 = vld [vmem:[%s383 + $0x1f8] sm:$0xff]
        %v448 = vld [vmem:[%s383 + $0x200] sm:$0xff]
        %v449 = vld [vmem:[%s383 + $0x208] sm:$0xff]
        %v450 = vld [vmem:[%s383 + $0x210] sm:$0xff]
        %v451 = vld [vmem:[%s383 + $0x218] sm:$0xff]
        %v452 = vld [vmem:[%s383 + $0x220] sm:$0xff]
        %v453 = vld [vmem:[%s383 + $0x228] sm:$0xff]
        %v454 = vld [vmem:[%s383 + $0x230] sm:$0xff]
        %v455 = vld [vmem:[%s383 + $0x238] sm:$0xff]
        %v456 = vld [vmem:[%s383 + $0x240] sm:$0xff]
        %v457 = vld [vmem:[%s383 + $0x248] sm:$0xff]
        %v458 = vld [vmem:[%s383 + $0x250] sm:$0xff]
        %v459 = vld [vmem:[%s383 + $0x258] sm:$0xff]
        %v460 = vld [vmem:[%s383 + $0x260] sm:$0xff]
        %v461 = vld [vmem:[%s383 + $0x268] sm:$0xff]
        %v462 = vld [vmem:[%s383 + $0x270] sm:$0xff]
        %v463 = vld [vmem:[%s383 + $0x278] sm:$0xff]
        %v464 = vld [vmem:[%s383 + $0x280] sm:$0xff]
        %v465 = vld [vmem:[%s383 + $0x288] sm:$0xff]
        %v466 = vld [vmem:[%s383 + $0x290] sm:$0xff]
        %v467 = vld [vmem:[%s383 + $0x298] sm:$0xff]
        %v468 = vld [vmem:[%s383 + $0x2a0] sm:$0xff]
        %v469 = vld [vmem:[%s383 + $0x2a8] sm:$0xff]
        %v470 = vld [vmem:[%s383 + $0x2b0] sm:$0xff]
        %v471 = vld [vmem:[%s383 + $0x2b8] sm:$0xff]
        %v472 = vld [vmem:[%s383 + $0x2c0] sm:$0xff]
        %v473 = vld [vmem:[%s383 + $0x2c8] sm:$0xff]
        %v474 = vld [vmem:[%s383 + $0x2d0] sm:$0xff]
        %v475 = vld [vmem:[%s383 + $0x2d8] sm:$0xff]
        %v476 = vld [vmem:[%s383 + $0x2e0] sm:$0xff]
        %v477 = vld [vmem:[%s383 + $0x2e8] sm:$0xff]
        %v478 = vld [vmem:[%s383 + $0x2f0] sm:$0xff]
        %v479 = vld [vmem:[%s383 + $0x2f8] sm:$0xff]
        %v480 = vld [vmem:[%s1] sm:$0xff]
        %v481 = vld [vmem:[%s1 + $0x8] sm:$0xff]
        %v482 = vld [vmem:[%s1 + $0x10] sm:$0xff]
        %v483 = vld [vmem:[%s1 + $0x18] sm:$0xff]
        %v484 = vld [vmem:[%s1 + $0x20] sm:$0xff]
        %v485 = vld [vmem:[%s1 + $0x28] sm:$0xff]
        %v486 = vld [vmem:[%s1 + $0x30] sm:$0xff]
        %v487 = vld [vmem:[%s1 + $0x38] sm:$0xff]
        %v488 = vld [vmem:[%s1 + $0x40] sm:$0xff]
        %v489 = vld [vmem:[%s1 + $0x48] sm:$0xff]
        %v490 = vld [vmem:[%s1 + $0x50] sm:$0xff]
        %v491 = vld [vmem:[%s1 + $0x58] sm:$0xff]
        %v492 = vld [vmem:[%s1 + $0x60] sm:$0xff]
        %v493 = vld [vmem:[%s1 + $0x68] sm:$0xff]
        %v494 = vld [vmem:[%s1 + $0x70] sm:$0xff]
        %v495 = vld [vmem:[%s1 + $0x78] sm:$0xff]
        %v496 = vld [vmem:[%s1 + $0x80] sm:$0xff]
        %v497 = vld [vmem:[%s1 + $0x88] sm:$0xff]
        %v498 = vld [vmem:[%s1 + $0x90] sm:$0xff]
        %v499 = vld [vmem:[%s1 + $0x98] sm:$0xff]
        %v500 = vld [vmem:[%s1 + $0xa0] sm:$0xff]
        %v501 = vld [vmem:[%s1 + $0xa8] sm:$0xff]
        %v502 = vld [vmem:[%s1 + $0xb0] sm:$0xff]
        %v503 = vld [vmem:[%s1 + $0xb8] sm:$0xff]
        %v504 = vld [vmem:[%s1 + $0xc0] sm:$0xff]
        %v505 = vld [vmem:[%s1 + $0xc8] sm:$0xff]
        %v506 = vld [vmem:[%s1 + $0xd0] sm:$0xff]
        %v507 = vld [vmem:[%s1 + $0xd8] sm:$0xff]
        %v508 = vld [vmem:[%s1 + $0xe0] sm:$0xff]
        %v509 = vld [vmem:[%s1 + $0xe8] sm:$0xff]
        %v510 = vld [vmem:[%s1 + $0xf0] sm:$0xff]
        %v511 = vld [vmem:[%s1 + $0xf8] sm:$0xff]
        %v512 = vld [vmem:[%s1 + $0x100] sm:$0xff]
        %v513 = vld [vmem:[%s1 + $0x108] sm:$0xff]
        %v514 = vld [vmem:[%s1 + $0x110] sm:$0xff]
        %v515 = vld [vmem:[%s1 + $0x118] sm:$0xff]
        %v516 = vld [vmem:[%s1 + $0x120] sm:$0xff]
        %v517 = vld [vmem:[%s1 + $0x128] sm:$0xff]
        %v518 = vld [vmem:[%s1 + $0x130] sm:$0xff]
        %v519 = vld [vmem:[%s1 + $0x138] sm:$0xff]
        %v520 = vld [vmem:[%s1 + $0x140] sm:$0xff]
        %v521 = vld [vmem:[%s1 + $0x148] sm:$0xff]
        %v522 = vld [vmem:[%s1 + $0x150] sm:$0xff]
        %v523 = vld [vmem:[%s1 + $0x158] sm:$0xff]
        %v524 = vld [vmem:[%s1 + $0x160] sm:$0xff]
        %v525 = vld [vmem:[%s1 + $0x168] sm:$0x7]
        %v526 = vld [vmem:[%s2] sm:$0x1]
        %v528 = vperm.slane %v526, 0
        %vm530 = vcmask 875520
        %v532 = vsel %vm530, %v386, 0
        %v535 = vsel %vm530, %v389, 0
        %v538 = vsel %vm530, %v392, 0
        %v541 = vsel %vm530, %v395, 0
        %v544 = vsel %vm530, %v398, 0
        %v547 = vsel %vm530, %v401, 0
        %v550 = vsel %vm530, %v404, 0
        %v553 = vsel %vm530, %v407, 0
        %v556 = vsel %vm530, %v410, 0
        %v559 = vsel %vm530, %v413, 0
        %v562 = vsel %vm530, %v416, 0
        %v565 = vsel %vm530, %v419, 0
        %v568 = vsel %vm530, %v422, 0
        %v571 = vsel %vm530, %v425, 0
        %v574 = vsel %vm530, %v428, 0
        %v577 = vsel %vm530, %v431, 0
        %v580 = vsel %vm530, %v434, 0
        %v583 = vsel %vm530, %v437, 0
        %v586 = vsel %vm530, %v440, 0
        %v589 = vsel %vm530, %v443, 0
        %v592 = vsel %vm530, %v446, 0
        %v595 = vsel %vm530, %v449, 0
        %v598 = vsel %vm530, %v452, 0
        %v601 = vsel %vm530, %v455, 0
        %v604 = vsel %vm530, %v458, 0
        %v607 = vsel %vm530, %v461, 0
        %v610 = vsel %vm530, %v464, 0
        %v613 = vsel %vm530, %v467, 0
        %v616 = vsel %vm530, %v470, 0
        %v619 = vsel %vm530, %v473, 0
        %v622 = vsel %vm530, %v476, 0
        %v625 = vsel %vm530, %v479, 0
        %vm627 = vcmask 1042432
        %v629 = vsel %vm627, %v525, 0
        %631 = vmatpush.msra.mxu0 %v495
        %632 = vmatpush.msra.mxu0 %v494
        %633 = vmatpush.msra.mxu0 %v493
        %634 = vmatpush.msra.mxu0 %v492
        %635 = vmatpush.msra.mxu0 %v491
        %636 = vmatpush.msra.mxu0 %v490
        %637 = vmatpush.msra.mxu0 %v489
        %638 = vmatpush.msra.mxu0 %v488
        %639 = vmatpush.msra.mxu0 %v487
        %640 = vmatpush.msra.mxu0 %v486
        %641 = vmatpush.msra.mxu0 %v485
        %642 = vmatpush.msra.mxu0 %v484
        %643 = vmatpush.msra.mxu0 %v483
        %644 = vmatpush.msra.mxu0 %v482
        %645 = vmatpush.msra.mxu0 %v481
        %646 = vmatpush.msra.mxu0 %v480
        %647 = vmatmul.f32.gmra.mxu0 %v384
        %v648 = vpop.f32.mrf.mxu0
        %v649 = vadd.f32 %v528, %v648
        %650 = vmatmul.f32.gmra.mxu0 %v387
        %v651 = vpop.f32.mrf.mxu0
        %v652 = vadd.f32 %v528, %v651
        %653 = vmatmul.f32.gmra.mxu0 %v390
        %v654 = vpop.f32.mrf.mxu0
        %v655 = vadd.f32 %v528, %v654
        %656 = vmatmul.f32.gmra.mxu0 %v393
        %v657 = vpop.f32.mrf.mxu0
        %v658 = vadd.f32 %v528, %v657
        %659 = vmatmul.f32.gmra.mxu0 %v396
        %v660 = vpop.f32.mrf.mxu0
        %v661 = vadd.f32 %v528, %v660
        %662 = vmatmul.f32.gmra.mxu0 %v399
        %v663 = vpop.f32.mrf.mxu0
        %v664 = vadd.f32 %v528, %v663
        %665 = vmatmul.f32.gmra.mxu0 %v402
        %v666 = vpop.f32.mrf.mxu0
        %v667 = vadd.f32 %v528, %v666
        %668 = vmatmul.f32.gmra.mxu0 %v405
        %v669 = vpop.f32.mrf.mxu0
        %v670 = vadd.f32 %v528, %v669
        %671 = vmatmul.f32.gmra.mxu0 %v408
        %v672 = vpop.f32.mrf.mxu0
        %v673 = vadd.f32 %v528, %v672
        %674 = vmatmul.f32.gmra.mxu0 %v411
        %v675 = vpop.f32.mrf.mxu0
        %v676 = vadd.f32 %v528, %v675
        %677 = vmatmul.f32.gmra.mxu0 %v414
        %v678 = vpop.f32.mrf.mxu0
        %v679 = vadd.f32 %v528, %v678
        %680 = vmatmul.f32.gmra.mxu0 %v417
        %v681 = vpop.f32.mrf.mxu0
        %v682 = vadd.f32 %v528, %v681
        %683 = vmatmul.f32.gmra.mxu0 %v420
        %v684 = vpop.f32.mrf.mxu0
        %v685 = vadd.f32 %v528, %v684
        %686 = vmatmul.f32.gmra.mxu0 %v423
        %v687 = vpop.f32.mrf.mxu0
        %v688 = vadd.f32 %v528, %v687
        %689 = vmatmul.f32.gmra.mxu0 %v426
        %v690 = vpop.f32.mrf.mxu0
        %v691 = vadd.f32 %v528, %v690
        %692 = vmatmul.f32.gmra.mxu0 %v429
        %v693 = vpop.f32.mrf.mxu0
        %v694 = vadd.f32 %v528, %v693
        %695 = vmatmul.f32.gmra.mxu0 %v432
        %v696 = vpop.f32.mrf.mxu0
        %v697 = vadd.f32 %v528, %v696
        %698 = vmatmul.f32.gmra.mxu0 %v435
        %v699 = vpop.f32.mrf.mxu0
        %v700 = vadd.f32 %v528, %v699
        %701 = vmatmul.f32.gmra.mxu0 %v438
        %v702 = vpop.f32.mrf.mxu0
        %v703 = vadd.f32 %v528, %v702
        %704 = vmatmul.f32.gmra.mxu0 %v441
        %v705 = vpop.f32.mrf.mxu0
        %v706 = vadd.f32 %v528, %v705
        %707 = vmatmul.f32.gmra.mxu0 %v444
        %v708 = vpop.f32.mrf.mxu0
        %v709 = vadd.f32 %v528, %v708
        %710 = vmatmul.f32.gmra.mxu0 %v447
        %v711 = vpop.f32.mrf.mxu0
        %v712 = vadd.f32 %v528, %v711
        %713 = vmatmul.f32.gmra.mxu0 %v450
        %v714 = vpop.f32.mrf.mxu0
        %v715 = vadd.f32 %v528, %v714
        %716 = vmatmul.f32.gmra.mxu0 %v453
        %v717 = vpop.f32.mrf.mxu0
        %v718 = vadd.f32 %v528, %v717
        %719 = vmatmul.f32.gmra.mxu0 %v456
        %v720 = vpop.f32.mrf.mxu0
        %v721 = vadd.f32 %v528, %v720
        %722 = vmatmul.f32.gmra.mxu0 %v459
        %v723 = vpop.f32.mrf.mxu0
        %v724 = vadd.f32 %v528, %v723
        %725 = vmatmul.f32.gmra.mxu0 %v462
        %v726 = vpop.f32.mrf.mxu0
        %v727 = vadd.f32 %v528, %v726
        %728 = vmatmul.f32.gmra.mxu0 %v465
        %v729 = vpop.f32.mrf.mxu0
        %v730 = vadd.f32 %v528, %v729
        %731 = vmatmul.f32.gmra.mxu0 %v468
        %v732 = vpop.f32.mrf.mxu0
        %v733 = vadd.f32 %v528, %v732
        %734 = vmatmul.f32.gmra.mxu0 %v471
        %v735 = vpop.f32.mrf.mxu0
        %v736 = vadd.f32 %v528, %v735
        %737 = vmatmul.f32.gmra.mxu0 %v474
        %v738 = vpop.f32.mrf.mxu0
        %v739 = vadd.f32 %v528, %v738
        %740 = vmatmul.f32.gmra.mxu0 %v477
        %v741 = vpop.f32.mrf.mxu0
        %v742 = vadd.f32 %v528, %v741
        %743 = vdwg.mxu0
        %744 = vmatpush.msra.mxu0 %v511
        %745 = vmatpush.msra.mxu0 %v510
        %746 = vmatpush.msra.mxu0 %v509
        %747 = vmatpush.msra.mxu0 %v508
        %748 = vmatpush.msra.mxu0 %v507
        %749 = vmatpush.msra.mxu0 %v506
        %750 = vmatpush.msra.mxu0 %v505
        %751 = vmatpush.msra.mxu0 %v504
        %752 = vmatpush.msra.mxu0 %v503
        %753 = vmatpush.msra.mxu0 %v502
        %754 = vmatpush.msra.mxu0 %v501
        %755 = vmatpush.msra.mxu0 %v500
        %756 = vmatpush.msra.mxu0 %v499
        %757 = vmatpush.msra.mxu0 %v498
        %758 = vmatpush.msra.mxu0 %v497
        %759 = vmatpush.msra.mxu0 %v496
        %760 = vmatmul.f32.gmra.mxu0 %v385
        %v761 = vpop.f32.mrf.mxu0
        %v762 = vadd.f32 %v649, %v761
        %763 = vmatmul.f32.gmra.mxu0 %v388
        %v764 = vpop.f32.mrf.mxu0
        %v765 = vadd.f32 %v652, %v764
        %766 = vmatmul.f32.gmra.mxu0 %v391
        %v767 = vpop.f32.mrf.mxu0
        %v768 = vadd.f32 %v655, %v767
        %769 = vmatmul.f32.gmra.mxu0 %v394
        %v770 = vpop.f32.mrf.mxu0
        %v771 = vadd.f32 %v658, %v770
        %772 = vmatmul.f32.gmra.mxu0 %v397
        %v773 = vpop.f32.mrf.mxu0
        %v774 = vadd.f32 %v661, %v773
        %775 = vmatmul.f32.gmra.mxu0 %v400
        %v776 = vpop.f32.mrf.mxu0
        %v777 = vadd.f32 %v664, %v776
        %778 = vmatmul.f32.gmra.mxu0 %v403
        %v779 = vpop.f32.mrf.mxu0
        %v780 = vadd.f32 %v667, %v779
        %781 = vmatmul.f32.gmra.mxu0 %v406
        %v782 = vpop.f32.mrf.mxu0
        %v783 = vadd.f32 %v670, %v782
        %784 = vmatmul.f32.gmra.mxu0 %v409
        %v785 = vpop.f32.mrf.mxu0
        %v786 = vadd.f32 %v673, %v785
        %787 = vmatmul.f32.gmra.mxu0 %v412
        %v788 = vpop.f32.mrf.mxu0
        %v789 = vadd.f32 %v676, %v788
        %790 = vmatmul.f32.gmra.mxu0 %v415
        %v791 = vpop.f32.mrf.mxu0
        %v792 = vadd.f32 %v679, %v791
        %793 = vmatmul.f32.gmra.mxu0 %v418
        %v794 = vpop.f32.mrf.mxu0
        %v795 = vadd.f32 %v682, %v794
        %796 = vmatmul.f32.gmra.mxu0 %v421
        %v797 = vpop.f32.mrf.mxu0
        %v798 = vadd.f32 %v685, %v797
        %799 = vmatmul.f32.gmra.mxu0 %v424
        %v800 = vpop.f32.mrf.mxu0
        %v801 = vadd.f32 %v688, %v800
        %802 = vmatmul.f32.gmra.mxu0 %v427
        %v803 = vpop.f32.mrf.mxu0
        %v804 = vadd.f32 %v691, %v803
        %805 = vmatmul.f32.gmra.mxu0 %v430
        %v806 = vpop.f32.mrf.mxu0
        %v807 = vadd.f32 %v694, %v806
        %808 = vmatmul.f32.gmra.mxu0 %v433
        %v809 = vpop.f32.mrf.mxu0
        %v810 = vadd.f32 %v697, %v809
        %811 = vmatmul.f32.gmra.mxu0 %v436
        %v812 = vpop.f32.mrf.mxu0
        %v813 = vadd.f32 %v700, %v812
        %814 = vmatmul.f32.gmra.mxu0 %v439
        %v815 = vpop.f32.mrf.mxu0
        %v816 = vadd.f32 %v703, %v815
        %817 = vmatmul.f32.gmra.mxu0 %v442
        %v818 = vpop.f32.mrf.mxu0
        %v819 = vadd.f32 %v706, %v818
        %820 = vmatmul.f32.gmra.mxu0 %v445
        %v821 = vpop.f32.mrf.mxu0
        %v822 = vadd.f32 %v709, %v821
        %823 = vmatmul.f32.gmra.mxu0 %v448
        %v824 = vpop.f32.mrf.mxu0
        %v825 = vadd.f32 %v712, %v824
        %826 = vmatmul.f32.gmra.mxu0 %v451
        %v827 = vpop.f32.mrf.mxu0
        %v828 = vadd.f32 %v715, %v827
        %829 = vmatmul.f32.gmra.mxu0 %v454
        %v830 = vpop.f32.mrf.mxu0
        %v831 = vadd.f32 %v718, %v830
        %832 = vmatmul.f32.gmra.mxu0 %v457
        %v833 = vpop.f32.mrf.mxu0
        %v834 = vadd.f32 %v721, %v833
        %835 = vmatmul.f32.gmra.mxu0 %v460
        %v836 = vpop.f32.mrf.mxu0
        %v837 = vadd.f32 %v724, %v836
        %838 = vmatmul.f32.gmra.mxu0 %v463
        %v839 = vpop.f32.mrf.mxu0
        %v840 = vadd.f32 %v727, %v839
        %841 = vmatmul.f32.gmra.mxu0 %v466
        %v842 = vpop.f32.mrf.mxu0
        %v843 = vadd.f32 %v730, %v842
        %844 = vmatmul.f32.gmra.mxu0 %v469
        %v845 = vpop.f32.mrf.mxu0
        %v846 = vadd.f32 %v733, %v845
        %847 = vmatmul.f32.gmra.mxu0 %v472
        %v848 = vpop.f32.mrf.mxu0
        %v849 = vadd.f32 %v736, %v848
        %850 = vmatmul.f32.gmra.mxu0 %v475
        %v851 = vpop.f32.mrf.mxu0
        %v852 = vadd.f32 %v739, %v851
        %853 = vmatmul.f32.gmra.mxu0 %v478
        %v854 = vpop.f32.mrf.mxu0
        %v855 = vadd.f32 %v742, %v854
        %856 = vdwg.mxu0
        %857 = vmatpush.msra.mxu0 0.0
        %858 = vmatpush.msra.mxu0 0.0
        %859 = vmatpush.msra.mxu0 %v629
        %860 = vmatpush.msra.mxu0 %v524
        %861 = vmatpush.msra.mxu0 %v523
        %862 = vmatpush.msra.mxu0 %v522
        %863 = vmatpush.msra.mxu0 %v521
        %864 = vmatpush.msra.mxu0 %v520
        %865 = vmatpush.msra.mxu0 %v519
        %866 = vmatpush.msra.mxu0 %v518
        %867 = vmatpush.msra.mxu0 %v517
        %868 = vmatpush.msra.mxu0 %v516
        %869 = vmatpush.msra.mxu0 %v515
        %870 = vmatpush.msra.mxu0 %v514
        %871 = vmatpush.msra.mxu0 %v513
        %872 = vmatpush.msra.mxu0 %v512
        %873 = vmatmul.f32.gmra.mxu0 %v532
        %v874 = vpop.f32.mrf.mxu0
        %v875 = vadd.f32 %v762, %v874
        %876 = vmatmul.f32.gmra.mxu0 %v535
        %v877 = vpop.f32.mrf.mxu0
        %v878 = vadd.f32 %v765, %v877
        %879 = vmatmul.f32.gmra.mxu0 %v538
        %v880 = vpop.f32.mrf.mxu0
        %v881 = vadd.f32 %v768, %v880
        %882 = vmatmul.f32.gmra.mxu0 %v541
        %v883 = vpop.f32.mrf.mxu0
        %v884 = vadd.f32 %v771, %v883
        %885 = vmatmul.f32.gmra.mxu0 %v544
        %v886 = vpop.f32.mrf.mxu0
        %v887 = vadd.f32 %v774, %v886
        %888 = vmatmul.f32.gmra.mxu0 %v547
        %v889 = vpop.f32.mrf.mxu0
        %v890 = vadd.f32 %v777, %v889
        %891 = vmatmul.f32.gmra.mxu0 %v550
        %v892 = vpop.f32.mrf.mxu0
        %v893 = vadd.f32 %v780, %v892
        %894 = vmatmul.f32.gmra.mxu0 %v553
        %v895 = vpop.f32.mrf.mxu0
        %v896 = vadd.f32 %v783, %v895
        %897 = vmatmul.f32.gmra.mxu0 %v556
        %v898 = vpop.f32.mrf.mxu0
        %v899 = vadd.f32 %v786, %v898
        %900 = vmatmul.f32.gmra.mxu0 %v559
        %v901 = vpop.f32.mrf.mxu0
        %v902 = vadd.f32 %v789, %v901
        %903 = vmatmul.f32.gmra.mxu0 %v562
        %v904 = vpop.f32.mrf.mxu0
        %v905 = vadd.f32 %v792, %v904
        %906 = vmatmul.f32.gmra.mxu0 %v565
        %v907 = vpop.f32.mrf.mxu0
        %v908 = vadd.f32 %v795, %v907
        %909 = vmatmul.f32.gmra.mxu0 %v568
        %v910 = vpop.f32.mrf.mxu0
        %v911 = vadd.f32 %v798, %v910
        %912 = vmatmul.f32.gmra.mxu0 %v571
        %v913 = vpop.f32.mrf.mxu0
        %v914 = vadd.f32 %v801, %v913
        %915 = vmatmul.f32.gmra.mxu0 %v574
        %v916 = vpop.f32.mrf.mxu0
        %v917 = vadd.f32 %v804, %v916
        %918 = vmatmul.f32.gmra.mxu0 %v577
        %v919 = vpop.f32.mrf.mxu0
        %v920 = vadd.f32 %v807, %v919
        %921 = vmatmul.f32.gmra.mxu0 %v580
        %v922 = vpop.f32.mrf.mxu0
        %v923 = vadd.f32 %v810, %v922
        %924 = vmatmul.f32.gmra.mxu0 %v583
        %v925 = vpop.f32.mrf.mxu0
        %v926 = vadd.f32 %v813, %v925
        %927 = vmatmul.f32.gmra.mxu0 %v586
        %v928 = vpop.f32.mrf.mxu0
        %v929 = vadd.f32 %v816, %v928
        %930 = vmatmul.f32.gmra.mxu0 %v589
        %v931 = vpop.f32.mrf.mxu0
        %v932 = vadd.f32 %v819, %v931
        %933 = vmatmul.f32.gmra.mxu0 %v592
        %v934 = vpop.f32.mrf.mxu0
        %v935 = vadd.f32 %v822, %v934
        %936 = vmatmul.f32.gmra.mxu0 %v595
        %v937 = vpop.f32.mrf.mxu0
        %v938 = vadd.f32 %v825, %v937
        %939 = vmatmul.f32.gmra.mxu0 %v598
        %v940 = vpop.f32.mrf.mxu0
        %v941 = vadd.f32 %v828, %v940
        %942 = vmatmul.f32.gmra.mxu0 %v601
        %v943 = vpop.f32.mrf.mxu0
        %v944 = vadd.f32 %v831, %v943
        %945 = vmatmul.f32.gmra.mxu0 %v604
        %v946 = vpop.f32.mrf.mxu0
        %v947 = vadd.f32 %v834, %v946
        %948 = vmatmul.f32.gmra.mxu0 %v607
        %v949 = vpop.f32.mrf.mxu0
        %v950 = vadd.f32 %v837, %v949
        %951 = vmatmul.f32.gmra.mxu0 %v610
        %v952 = vpop.f32.mrf.mxu0
        %v953 = vadd.f32 %v840, %v952
        %954 = vmatmul.f32.gmra.mxu0 %v613
        %v955 = vpop.f32.mrf.mxu0
        %v956 = vadd.f32 %v843, %v955
        %957 = vmatmul.f32.gmra.mxu0 %v616
        %v958 = vpop.f32.mrf.mxu0
        %v959 = vadd.f32 %v846, %v958
        %960 = vmatmul.f32.gmra.mxu0 %v619
        %v961 = vpop.f32.mrf.mxu0
        %v962 = vadd.f32 %v849, %v961
        %963 = vmatmul.f32.gmra.mxu0 %v622
        %v964 = vpop.f32.mrf.mxu0
        %v965 = vadd.f32 %v852, %v964
        %966 = vmatmul.f32.gmra.mxu0 %v625
        %v967 = vpop.f32.mrf.mxu0
        %v968 = vadd.f32 %v855, %v967
        %969 = vdwg.mxu0
        %v970 = vmax.f32 %v875, 0.0
        %v971 = vmax.f32 %v878, 0.0
        %v972 = vmax.f32 %v881, 0.0
        %v973 = vmax.f32 %v884, 0.0
        %v974 = vmax.f32 %v887, 0.0
        %v975 = vmax.f32 %v890, 0.0
        %v976 = vmax.f32 %v893, 0.0
        %v977 = vmax.f32 %v896, 0.0
        %v978 = vmax.f32 %v899, 0.0
        %v979 = vmax.f32 %v902, 0.0
        %v980 = vmax.f32 %v905, 0.0
        %v981 = vmax.f32 %v908, 0.0
        %v982 = vmax.f32 %v911, 0.0
        %v983 = vmax.f32 %v914, 0.0
        %v984 = vmax.f32 %v917, 0.0
        %v985 = vmax.f32 %v920, 0.0
        %v986 = vmax.f32 %v923, 0.0
        %v987 = vmax.f32 %v926, 0.0
        %v988 = vmax.f32 %v929, 0.0
        %v989 = vmax.f32 %v932, 0.0
        %v990 = vmax.f32 %v935, 0.0
        %v991 = vmax.f32 %v938, 0.0
        %v992 = vmax.f32 %v941, 0.0
        %v993 = vmax.f32 %v944, 0.0
        %v994 = vmax.f32 %v947, 0.0
        %v995 = vmax.f32 %v950, 0.0
        %v996 = vmax.f32 %v953, 0.0
        %v997 = vmax.f32 %v956, 0.0
        %v998 = vmax.f32 %v959, 0.0
        %v999 = vmax.f32 %v962, 0.0
        %v1000 = vmax.f32 %v965, 0.0
        %v1001 = vmax.f32 %v968, 0.0
        %vm1002 = vcmask 64512
        %1003 = vst.msk [vmem:[#allocation2] sm:$0xff] %vm1002, 0.0
        %1004 = vst.msk [vmem:[#allocation2 + $0x8] sm:$0xff] %vm1002, 0.0
        %vm1005 = vcmask 58368
        %1006 = vst.msk [vmem:[#allocation2 + $0x10] sm:$0x3] %vm1005, 0.0
        %1007 = vst.msk [vmem:[#allocation2 + $0x18] sm:$0xff] %vm1002, 0.0
        %1008 = vst.msk [vmem:[#allocation2 + $0x20] sm:$0xff] %vm1002, 0.0
        %1009 = vst.msk [vmem:[#allocation2 + $0x28] sm:$0x3] %vm1005, 0.0
        %1010 = vst.msk [vmem:[#allocation2 + $0x30] sm:$0xff] %vm1002, 0.0
        %1011 = vst.msk [vmem:[#allocation2 + $0x38] sm:$0xff] %vm1002, 0.0
        %1012 = vst.msk [vmem:[#allocation2 + $0x40] sm:$0x3] %vm1005, 0.0
        %1013 = vst.msk [vmem:[#allocation2 + $0x48] sm:$0xff] %vm1002, 0.0
        %1014 = vst.msk [vmem:[#allocation2 + $0x50] sm:$0xff] %vm1002, 0.0
        %1015 = vst.msk [vmem:[#allocation2 + $0x58] sm:$0x3] %vm1005, 0.0
        %1016 = vst.msk [vmem:[#allocation2 + $0x60] sm:$0xff] %vm1002, 0.0
        %1017 = vst.msk [vmem:[#allocation2 + $0x68] sm:$0xff] %vm1002, 0.0
        %1018 = vst.msk [vmem:[#allocation2 + $0x70] sm:$0x3] %vm1005, 0.0
        %1019 = vst.msk [vmem:[#allocation2 + $0x78] sm:$0xff] %vm1002, 0.0
        %1020 = vst.msk [vmem:[#allocation2 + $0x80] sm:$0xff] %vm1002, 0.0
        %1021 = vst.msk [vmem:[#allocation2 + $0x88] sm:$0x3] %vm1005, 0.0
        %1022 = vst.msk [vmem:[#allocation2 + $0x90] sm:$0xff] %vm1002, 0.0
        %1023 = vst.msk [vmem:[#allocation2 + $0x98] sm:$0xff] %vm1002, 0.0
        %1024 = vst.msk [vmem:[#allocation2 + $0xa0] sm:$0x3] %vm1005, 0.0
        %1025 = vst.msk [vmem:[#allocation2 + $0xa8] sm:$0xff] %vm1002, 0.0
        %1026 = vst.msk [vmem:[#allocation2 + $0xb0] sm:$0xff] %vm1002, 0.0
        %1027 = vst.msk [vmem:[#allocation2 + $0xb8] sm:$0x3] %vm1005, 0.0
        %1028 = vst.msk [vmem:[#allocation2 + $0xc0] sm:$0xff] %vm1002, 0.0
        %1029 = vst.msk [vmem:[#allocation2 + $0xc8] sm:$0xff] %vm1002, 0.0
        %1030 = vst.msk [vmem:[#allocation2 + $0xd0] sm:$0x3] %vm1005, 0.0
        %1031 = vst.msk [vmem:[#allocation2 + $0xd8] sm:$0xff] %vm1002, 0.0
        %1032 = vst.msk [vmem:[#allocation2 + $0xe0] sm:$0xff] %vm1002, 0.0
        %1033 = vst.msk [vmem:[#allocation2 + $0xe8] sm:$0x3] %vm1005, 0.0
        %1034 = vst.msk [vmem:[#allocation2 + $0xf0] sm:$0xff] %vm1002, 0.0
        %1035 = vst.msk [vmem:[#allocation2 + $0xf8] sm:$0xff] %vm1002, 0.0
        %1036 = vst.msk [vmem:[#allocation2 + $0x100] sm:$0x3] %vm1005, 0.0
        %1037 = vst.msk [vmem:[#allocation2 + $0x108] sm:$0xff] %vm1002, 0.0
        %1038 = vst.msk [vmem:[#allocation2 + $0x110] sm:$0xff] %vm1002, 0.0
        %1039 = vst.msk [vmem:[#allocation2 + $0x118] sm:$0x3] %vm1005, 0.0
        %1040 = vst.msk [vmem:[#allocation2 + $0x120] sm:$0xff] %vm1002, 0.0
        %1041 = vst.msk [vmem:[#allocation2 + $0x128] sm:$0xff] %vm1002, 0.0
        %1042 = vst.msk [vmem:[#allocation2 + $0x130] sm:$0x3] %vm1005, 0.0
        %1043 = vst.msk [vmem:[#allocation2 + $0x138] sm:$0xff] %vm1002, 0.0
        %1044 = vst.msk [vmem:[#allocation2 + $0x140] sm:$0xff] %vm1002, 0.0
        %1045 = vst.msk [vmem:[#allocation2 + $0x148] sm:$0x3] %vm1005, 0.0
        %1046 = vst.msk [vmem:[#allocation2 + $0x150] sm:$0xff] %vm1002, 0.0
        %1047 = vst.msk [vmem:[#allocation2 + $0x158] sm:$0xff] %vm1002, 0.0
        %1048 = vst.msk [vmem:[#allocation2 + $0x160] sm:$0x3] %vm1005, 0.0
        %1049 = vst.msk [vmem:[#allocation2 + $0x168] sm:$0xff] %vm1002, 0.0
        %1050 = vst.msk [vmem:[#allocation2 + $0x170] sm:$0xff] %vm1002, 0.0
        %1051 = vst.msk [vmem:[#allocation2 + $0x178] sm:$0x3] %vm1005, 0.0
        %1052 = vst.msk [vmem:[#allocation2 + $0x180] sm:$0xff] %vm1002, 0.0
        %1053 = vst.msk [vmem:[#allocation2 + $0x188] sm:$0xff] %vm1002, 0.0
        %1054 = vst.msk [vmem:[#allocation2 + $0x190] sm:$0x3] %vm1005, 0.0
        %1055 = vst.msk [vmem:[#allocation2 + $0x198] sm:$0xff] %vm1002, 0.0
        %1056 = vst.msk [vmem:[#allocation2 + $0x1a0] sm:$0xff] %vm1002, 0.0
        %1057 = vst.msk [vmem:[#allocation2 + $0x1a8] sm:$0x3] %vm1005, 0.0
        %s1058 = scalar_lea.vmem [#allocation2], 24
        %1059 = vst.msk [vmem:[%s1058 + $0x1] sm:$0xff] %vm1002, %v970
        %1060 = vst.msk [vmem:[%s1058 + $0x9] sm:$0xff] %vm1002, %v971
        %1061 = vst.msk [vmem:[%s1058 + $0x19] sm:$0xff] %vm1002, %v972
        %1062 = vst.msk [vmem:[%s1058 + $0x21] sm:$0xff] %vm1002, %v973
        %1063 = vst.msk [vmem:[%s1058 + $0x31] sm:$0xff] %vm1002, %v974
        %1064 = vst.msk [vmem:[%s1058 + $0x39] sm:$0xff] %vm1002, %v975
        %1065 = vst.msk [vmem:[%s1058 + $0x49] sm:$0xff] %vm1002, %v976
        %1066 = vst.msk [vmem:[%s1058 + $0x51] sm:$0xff] %vm1002, %v977
        %1067 = vst.msk [vmem:[%s1058 + $0x61] sm:$0xff] %vm1002, %v978
        %1068 = vst.msk [vmem:[%s1058 + $0x69] sm:$0xff] %vm1002, %v979
        %1069 = vst.msk [vmem:[%s1058 + $0x79] sm:$0xff] %vm1002, %v980
        %1070 = vst.msk [vmem:[%s1058 + $0x81] sm:$0xff] %vm1002, %v981
        %1071 = vst.msk [vmem:[%s1058 + $0x91] sm:$0xff] %vm1002, %v982
        %1072 = vst.msk [vmem:[%s1058 + $0x99] sm:$0xff] %vm1002, %v983
        %1073 = vst.msk [vmem:[%s1058 + $0xa9] sm:$0xff] %vm1002, %v984
        %1074 = vst.msk [vmem:[%s1058 + $0xb1] sm:$0xff] %vm1002, %v985
        %1075 = vst.msk [vmem:[%s1058 + $0xc1] sm:$0xff] %vm1002, %v986
        %1076 = vst.msk [vmem:[%s1058 + $0xc9] sm:$0xff] %vm1002, %v987
        %1077 = vst.msk [vmem:[%s1058 + $0xd9] sm:$0xff] %vm1002, %v988
        %1078 = vst.msk [vmem:[%s1058 + $0xe1] sm:$0xff] %vm1002, %v989
        %1079 = vst.msk [vmem:[%s1058 + $0xf1] sm:$0xff] %vm1002, %v990
        %1080 = vst.msk [vmem:[%s1058 + $0xf9] sm:$0xff] %vm1002, %v991
        %1081 = vst.msk [vmem:[%s1058 + $0x109] sm:$0xff] %vm1002, %v992
        %1082 = vst.msk [vmem:[%s1058 + $0x111] sm:$0xff] %vm1002, %v993
        %1083 = vst.msk [vmem:[%s1058 + $0x121] sm:$0xff] %vm1002, %v994
        %1084 = vst.msk [vmem:[%s1058 + $0x129] sm:$0xff] %vm1002, %v995
        %1085 = vst.msk [vmem:[%s1058 + $0x139] sm:$0xff] %vm1002, %v996
        %1086 = vst.msk [vmem:[%s1058 + $0x141] sm:$0xff] %vm1002, %v997
        %1087 = vst.msk [vmem:[%s1058 + $0x151] sm:$0xff] %vm1002, %v998
        %1088 = vst.msk [vmem:[%s1058 + $0x159] sm:$0xff] %vm1002, %v999
        %1089 = vst.msk [vmem:[%s1058 + $0x169] sm:$0xff] %vm1002, %v1000
        %1090 = vst.msk [vmem:[%s1058 + $0x171] sm:$0xff] %vm1002, %v1001
        %v1091 = vld [vmem:[#allocation2] ss:$2 sm:$0xff]
        %s1092 = scalar_lea.vmem [#allocation2], 48
        %v1093 = vld [vmem:[%s1092] ss:$2 sm:$0xff]
        %s1094 = scalar_lea.vmem [#allocation2], 96
        %v1095 = vld [vmem:[%s1094] ss:$2 sm:$0xff]
        %s1096 = scalar_lea.vmem [#allocation2], 144
        %v1097 = vld [vmem:[%s1096] ss:$2 sm:$0xff]
        %s1098 = scalar_lea.vmem [#allocation2], 192
        %v1099 = vld [vmem:[%s1098] ss:$2 sm:$0xff]
        %s1100 = scalar_lea.vmem [#allocation2], 240
        %v1101 = vld [vmem:[%s1100] ss:$2 sm:$0xff]
        %s1102 = scalar_lea.vmem [#allocation2], 288
        %v1103 = vld [vmem:[%s1102] ss:$2 sm:$0xff]
        %s1104 = scalar_lea.vmem [#allocation2], 336
        %v1105 = vld [vmem:[%s1104] ss:$2 sm:$0xff]
        %s1106 = scalar_lea.vmem [#allocation2], 1
        %v1107 = vld [vmem:[%s1106] ss:$2 sm:$0xff]
        %s1108 = scalar_lea.vmem [#allocation2], 49
        %v1109 = vld [vmem:[%s1108] ss:$2 sm:$0xff]
        %s1110 = scalar_lea.vmem [#allocation2], 97
        %v1111 = vld [vmem:[%s1110] ss:$2 sm:$0xff]
        %s1112 = scalar_lea.vmem [#allocation2], 145
        %v1113 = vld [vmem:[%s1112] ss:$2 sm:$0xff]
        %s1114 = scalar_lea.vmem [#allocation2], 193
        %v1115 = vld [vmem:[%s1114] ss:$2 sm:$0xff]
        %s1116 = scalar_lea.vmem [#allocation2], 241
        %v1117 = vld [vmem:[%s1116] ss:$2 sm:$0xff]
        %s1118 = scalar_lea.vmem [#allocation2], 289
        %v1119 = vld [vmem:[%s1118] ss:$2 sm:$0xff]
        %s1120 = scalar_lea.vmem [#allocation2], 337
        %v1121 = vld [vmem:[%s1120] ss:$2 sm:$0xff]
        %s1122 = scalar_lea.vmem [#allocation2], 2
        %v1123 = vld [vmem:[%s1122] ss:$2 sm:$0xff]
        %s1124 = scalar_lea.vmem [#allocation2], 50
        %v1125 = vld [vmem:[%s1124] ss:$2 sm:$0xff]
        %s1126 = scalar_lea.vmem [#allocation2], 98
        %v1127 = vld [vmem:[%s1126] ss:$2 sm:$0xff]
        %s1128 = scalar_lea.vmem [#allocation2], 146
        %v1129 = vld [vmem:[%s1128] ss:$2 sm:$0xff]
        %s1130 = scalar_lea.vmem [#allocation2], 194
        %v1131 = vld [vmem:[%s1130] ss:$2 sm:$0xff]
        %s1132 = scalar_lea.vmem [#allocation2], 242
        %v1133 = vld [vmem:[%s1132] ss:$2 sm:$0xff]
        %s1134 = scalar_lea.vmem [#allocation2], 290
        %v1135 = vld [vmem:[%s1134] ss:$2 sm:$0xff]
        %s1136 = scalar_lea.vmem [#allocation2], 338
        %v1137 = vld [vmem:[%s1136] ss:$2 sm:$0xff]
        %v1138 = vld [vmem:[%s1058] ss:$2 sm:$0xff]
        %s1139 = scalar_lea.vmem %s1058, 48 [#allocation2]
        %v1140 = vld [vmem:[%s1139] ss:$2 sm:$0xff]
        %s1141 = scalar_lea.vmem %s1058, 96 [#allocation2]
        %v1142 = vld [vmem:[%s1141] ss:$2 sm:$0xff]
        %s1143 = scalar_lea.vmem %s1058, 144 [#allocation2]
        %v1144 = vld [vmem:[%s1143] ss:$2 sm:$0xff]
        %s1145 = scalar_lea.vmem %s1058, 192 [#allocation2]
        %v1146 = vld [vmem:[%s1145] ss:$2 sm:$0xff]
        %s1147 = scalar_lea.vmem %s1058, 240 [#allocation2]
        %v1148 = vld [vmem:[%s1147] ss:$2 sm:$0xff]
        %s1149 = scalar_lea.vmem %s1058, 288 [#allocation2]
        %v1150 = vld [vmem:[%s1149] ss:$2 sm:$0xff]
        %s1151 = scalar_lea.vmem %s1058, 336 [#allocation2]
        %v1152 = vld [vmem:[%s1151] ss:$2 sm:$0xff]
        %s1153 = scalar_lea.vmem %s1058, 1 [#allocation2]
        %v1154 = vld [vmem:[%s1153] ss:$2 sm:$0xff]
        %s1155 = scalar_lea.vmem %s1058, 49 [#allocation2]
        %v1156 = vld [vmem:[%s1155] ss:$2 sm:$0xff]
        %s1157 = scalar_lea.vmem %s1058, 97 [#allocation2]
        %v1158 = vld [vmem:[%s1157] ss:$2 sm:$0xff]
        %s1159 = scalar_lea.vmem %s1058, 145 [#allocation2]
        %v1160 = vld [vmem:[%s1159] ss:$2 sm:$0xff]
        %s1161 = scalar_lea.vmem %s1058, 193 [#allocation2]
        %v1162 = vld [vmem:[%s1161] ss:$2 sm:$0xff]
        %s1163 = scalar_lea.vmem %s1058, 241 [#allocation2]
        %v1164 = vld [vmem:[%s1163] ss:$2 sm:$0xff]
        %s1165 = scalar_lea.vmem %s1058, 289 [#allocation2]
        %v1166 = vld [vmem:[%s1165] ss:$2 sm:$0xff]
        %s1167 = scalar_lea.vmem %s1058, 337 [#allocation2]
        %v1168 = vld [vmem:[%s1167] ss:$2 sm:$0xff]
        %s1169 = scalar_lea.vmem %s1058, 2 [#allocation2]
        %v1170 = vld [vmem:[%s1169] ss:$2 sm:$0xff]
        %s1171 = scalar_lea.vmem %s1058, 50 [#allocation2]
        %v1172 = vld [vmem:[%s1171] ss:$2 sm:$0xff]
        %s1173 = scalar_lea.vmem %s1058, 98 [#allocation2]
        %v1174 = vld [vmem:[%s1173] ss:$2 sm:$0xff]
        %s1175 = scalar_lea.vmem %s1058, 146 [#allocation2]
        %v1176 = vld [vmem:[%s1175] ss:$2 sm:$0xff]
        %s1177 = scalar_lea.vmem %s1058, 194 [#allocation2]
        %v1178 = vld [vmem:[%s1177] ss:$2 sm:$0xff]
        %s1179 = scalar_lea.vmem %s1058, 242 [#allocation2]
        %v1180 = vld [vmem:[%s1179] ss:$2 sm:$0xff]
        %s1181 = scalar_lea.vmem %s1058, 290 [#allocation2]
        %v1182 = vld [vmem:[%s1181] ss:$2 sm:$0xff]
        %s1183 = scalar_lea.vmem %s1058, 338 [#allocation2]
        %v1184 = vld [vmem:[%s1183] ss:$2 sm:$0xff]
        %s1185 = scalar_lea.vmem [#allocation2], 48
        %v1186 = vld [vmem:[%s1185] ss:$2 sm:$0xff]
        %s1187 = scalar_lea.vmem %s1185, 48 [#allocation2]
        %v1188 = vld [vmem:[%s1187] ss:$2 sm:$0xff]
        %s1189 = scalar_lea.vmem %s1185, 96 [#allocation2]
        %v1190 = vld [vmem:[%s1189] ss:$2 sm:$0xff]
        %s1191 = scalar_lea.vmem %s1185, 144 [#allocation2]
        %v1192 = vld [vmem:[%s1191] ss:$2 sm:$0xff]
        %s1193 = scalar_lea.vmem %s1185, 192 [#allocation2]
        %v1194 = vld [vmem:[%s1193] ss:$2 sm:$0xff]
        %s1195 = scalar_lea.vmem %s1185, 240 [#allocation2]
        %v1196 = vld [vmem:[%s1195] ss:$2 sm:$0xff]
        %s1197 = scalar_lea.vmem %s1185, 288 [#allocation2]
        %v1198 = vld [vmem:[%s1197] ss:$2 sm:$0xff]
        %s1199 = scalar_lea.vmem %s1185, 336 [#allocation2]
        %v1200 = vld [vmem:[%s1199] ss:$2 sm:$0xff]
        %s1201 = scalar_lea.vmem %s1185, 1 [#allocation2]
        %v1202 = vld [vmem:[%s1201] ss:$2 sm:$0xff]
        %s1203 = scalar_lea.vmem %s1185, 49 [#allocation2]
        %v1204 = vld [vmem:[%s1203] ss:$2 sm:$0xff]
        %s1205 = scalar_lea.vmem %s1185, 97 [#allocation2]
        %v1206 = vld [vmem:[%s1205] ss:$2 sm:$0xff]
        %s1207 = scalar_lea.vmem %s1185, 145 [#allocation2]
        %v1208 = vld [vmem:[%s1207] ss:$2 sm:$0xff]
        %s1209 = scalar_lea.vmem %s1185, 193 [#allocation2]
        %v1210 = vld [vmem:[%s1209] ss:$2 sm:$0xff]
        %s1211 = scalar_lea.vmem %s1185, 241 [#allocation2]
        %v1212 = vld [vmem:[%s1211] ss:$2 sm:$0xff]
        %s1213 = scalar_lea.vmem %s1185, 289 [#allocation2]
        %v1214 = vld [vmem:[%s1213] ss:$2 sm:$0xff]
        %s1215 = scalar_lea.vmem %s1185, 337 [#allocation2]
        %v1216 = vld [vmem:[%s1215] ss:$2 sm:$0xff]
        %s1217 = scalar_lea.vmem %s1185, 2 [#allocation2]
        %v1218 = vld [vmem:[%s1217] ss:$2 sm:$0xff]
        %s1219 = scalar_lea.vmem %s1185, 50 [#allocation2]
        %v1220 = vld [vmem:[%s1219] ss:$2 sm:$0xff]
        %s1221 = scalar_lea.vmem %s1185, 98 [#allocation2]
        %v1222 = vld [vmem:[%s1221] ss:$2 sm:$0xff]
        %s1223 = scalar_lea.vmem %s1185, 146 [#allocation2]
        %v1224 = vld [vmem:[%s1223] ss:$2 sm:$0xff]
        %s1225 = scalar_lea.vmem %s1185, 194 [#allocation2]
        %v1226 = vld [vmem:[%s1225] ss:$2 sm:$0xff]
        %s1227 = scalar_lea.vmem %s1185, 242 [#allocation2]
        %v1228 = vld [vmem:[%s1227] ss:$2 sm:$0xff]
        %s1229 = scalar_lea.vmem %s1185, 290 [#allocation2]
        %v1230 = vld [vmem:[%s1229] ss:$2 sm:$0xff]
        %s1231 = scalar_lea.vmem %s1185, 338 [#allocation2]
        %v1232 = vld [vmem:[%s1231] ss:$2 sm:$0xff]
        %1241 = vrot.lane.b32.xlu0 %v1107, 8
        %v1242 = vpop.permute.xlu0 %1241
        %1243 = vrot.lane.b32.xlu0 %v1109, 8
        %v1244 = vpop.permute.xlu0 %1243
        %1245 = vrot.lane.b32.xlu0 %v1111, 8
        %v1246 = vpop.permute.xlu0 %1245
        %1247 = vrot.lane.b32.xlu0 %v1113, 8
        %v1248 = vpop.permute.xlu0 %1247
        %1249 = vrot.lane.b32.xlu0 %v1115, 8
        %v1250 = vpop.permute.xlu0 %1249
        %1251 = vrot.lane.b32.xlu0 %v1117, 8
        %v1252 = vpop.permute.xlu0 %1251
        %1253 = vrot.lane.b32.xlu0 %v1119, 8
        %v1254 = vpop.permute.xlu0 %1253
        %1255 = vrot.lane.b32.xlu0 %v1121, 8
        %v1256 = vpop.permute.xlu0 %1255
        %1273 = vrot.lane.b32.xlu0 %v1123, 16
        %v1274 = vpop.permute.xlu0 %1273
        %1275 = vrot.lane.b32.xlu0 %v1125, 16
        %v1276 = vpop.permute.xlu0 %1275
        %1277 = vrot.lane.b32.xlu0 %v1127, 16
        %v1278 = vpop.permute.xlu0 %1277
        %1279 = vrot.lane.b32.xlu0 %v1129, 16
        %v1280 = vpop.permute.xlu0 %1279
        %1281 = vrot.lane.b32.xlu0 %v1131, 16
        %v1282 = vpop.permute.xlu0 %1281
        %1283 = vrot.lane.b32.xlu0 %v1133, 16
        %v1284 = vpop.permute.xlu0 %1283
        %1285 = vrot.lane.b32.xlu0 %v1135, 16
        %v1286 = vpop.permute.xlu0 %1285
        %1287 = vrot.lane.b32.xlu0 %v1137, 16
        %v1288 = vpop.permute.xlu0 %1287
        %1305 = vrot.lane.b32.xlu0 %v1138, 24
        %v1306 = vpop.permute.xlu0 %1305
        %1307 = vrot.lane.b32.xlu0 %v1140, 24
        %v1308 = vpop.permute.xlu0 %1307
        %1309 = vrot.lane.b32.xlu0 %v1142, 24
        %v1310 = vpop.permute.xlu0 %1309
        %1311 = vrot.lane.b32.xlu0 %v1144, 24
        %v1312 = vpop.permute.xlu0 %1311
        %1313 = vrot.lane.b32.xlu0 %v1146, 24
        %v1314 = vpop.permute.xlu0 %1313
        %1315 = vrot.lane.b32.xlu0 %v1148, 24
        %v1316 = vpop.permute.xlu0 %1315
        %1317 = vrot.lane.b32.xlu0 %v1150, 24
        %v1318 = vpop.permute.xlu0 %1317
        %1319 = vrot.lane.b32.xlu0 %v1152, 24
        %v1320 = vpop.permute.xlu0 %1319
        %1337 = vrot.lane.b32.xlu0 %v1154, 32
        %v1338 = vpop.permute.xlu0 %1337
        %1339 = vrot.lane.b32.xlu0 %v1156, 32
        %v1340 = vpop.permute.xlu0 %1339
        %1341 = vrot.lane.b32.xlu0 %v1158, 32
        %v1342 = vpop.permute.xlu0 %1341
        %1343 = vrot.lane.b32.xlu0 %v1160, 32
        %v1344 = vpop.permute.xlu0 %1343
        %1345 = vrot.lane.b32.xlu0 %v1162, 32
        %v1346 = vpop.permute.xlu0 %1345
        %1347 = vrot.lane.b32.xlu0 %v1164, 32
        %v1348 = vpop.permute.xlu0 %1347
        %1349 = vrot.lane.b32.xlu0 %v1166, 32
        %v1350 = vpop.permute.xlu0 %1349
        %1351 = vrot.lane.b32.xlu0 %v1168, 32
        %v1352 = vpop.permute.xlu0 %1351
        %1369 = vrot.lane.b32.xlu0 %v1170, 40
        %v1370 = vpop.permute.xlu0 %1369
        %1371 = vrot.lane.b32.xlu0 %v1172, 40
        %v1372 = vpop.permute.xlu0 %1371
        %1373 = vrot.lane.b32.xlu0 %v1174, 40
        %v1374 = vpop.permute.xlu0 %1373
        %1375 = vrot.lane.b32.xlu0 %v1176, 40
        %v1376 = vpop.permute.xlu0 %1375
        %1377 = vrot.lane.b32.xlu0 %v1178, 40
        %v1378 = vpop.permute.xlu0 %1377
        %1379 = vrot.lane.b32.xlu0 %v1180, 40
        %v1380 = vpop.permute.xlu0 %1379
        %1381 = vrot.lane.b32.xlu0 %v1182, 40
        %v1382 = vpop.permute.xlu0 %1381
        %1383 = vrot.lane.b32.xlu0 %v1184, 40
        %v1384 = vpop.permute.xlu0 %1383
        %1401 = vrot.lane.b32.xlu0 %v1186, 48
        %v1402 = vpop.permute.xlu0 %1401
        %1403 = vrot.lane.b32.xlu0 %v1188, 48
        %v1404 = vpop.permute.xlu0 %1403
        %1405 = vrot.lane.b32.xlu0 %v1190, 48
        %v1406 = vpop.permute.xlu0 %1405
        %1407 = vrot.lane.b32.xlu0 %v1192, 48
        %v1408 = vpop.permute.xlu0 %1407
        %1409 = vrot.lane.b32.xlu0 %v1194, 48
        %v1410 = vpop.permute.xlu0 %1409
        %1411 = vrot.lane.b32.xlu0 %v1196, 48
        %v1412 = vpop.permute.xlu0 %1411
        %1413 = vrot.lane.b32.xlu0 %v1198, 48
        %v1414 = vpop.permute.xlu0 %1413
        %1415 = vrot.lane.b32.xlu0 %v1200, 48
        %v1416 = vpop.permute.xlu0 %1415
        %1433 = vrot.lane.b32.xlu0 %v1202, 56
        %v1434 = vpop.permute.xlu0 %1433
        %1435 = vrot.lane.b32.xlu0 %v1204, 56
        %v1436 = vpop.permute.xlu0 %1435
        %1437 = vrot.lane.b32.xlu0 %v1206, 56
        %v1438 = vpop.permute.xlu0 %1437
        %1439 = vrot.lane.b32.xlu0 %v1208, 56
        %v1440 = vpop.permute.xlu0 %1439
        %1441 = vrot.lane.b32.xlu0 %v1210, 56
        %v1442 = vpop.permute.xlu0 %1441
        %1443 = vrot.lane.b32.xlu0 %v1212, 56
        %v1444 = vpop.permute.xlu0 %1443
        %1445 = vrot.lane.b32.xlu0 %v1214, 56
        %v1446 = vpop.permute.xlu0 %1445
        %1447 = vrot.lane.b32.xlu0 %v1216, 56
        %v1448 = vpop.permute.xlu0 %1447
        %1465 = vrot.lane.b32.xlu0 %v1218, 64
        %v1466 = vpop.permute.xlu0 %1465
        %1467 = vrot.lane.b32.xlu0 %v1220, 64
        %v1468 = vpop.permute.xlu0 %1467
        %1469 = vrot.lane.b32.xlu0 %v1222, 64
        %v1470 = vpop.permute.xlu0 %1469
        %1471 = vrot.lane.b32.xlu0 %v1224, 64
        %v1472 = vpop.permute.xlu0 %1471
        %1473 = vrot.lane.b32.xlu0 %v1226, 64
        %v1474 = vpop.permute.xlu0 %1473
        %1475 = vrot.lane.b32.xlu0 %v1228, 64
        %v1476 = vpop.permute.xlu0 %1475
        %1477 = vrot.lane.b32.xlu0 %v1230, 64
        %v1478 = vpop.permute.xlu0 %1477
        %1479 = vrot.lane.b32.xlu0 %v1232, 64
        %v1480 = vpop.permute.xlu0 %1479
        %v1489 = vsel %vm1002, %v1091, %v1242
        %v1490 = vsel %vm1002, %v1093, %v1244
        %v1491 = vsel %vm1002, %v1095, %v1246
        %v1492 = vsel %vm1002, %v1097, %v1248
        %v1493 = vsel %vm1002, %v1099, %v1250
        %v1494 = vsel %vm1002, %v1101, %v1252
        %v1495 = vsel %vm1002, %v1103, %v1254
        %v1496 = vsel %vm1002, %v1105, %v1256
        %vm1497 = vcmask 130048
        %v1498 = vsel %vm1497, %v1489, %v1274
        %v1499 = vsel %vm1497, %v1490, %v1276
        %v1500 = vsel %vm1497, %v1491, %v1278
        %v1501 = vsel %vm1497, %v1492, %v1280
        %v1502 = vsel %vm1497, %v1493, %v1282
        %v1503 = vsel %vm1497, %v1494, %v1284
        %v1504 = vsel %vm1497, %v1495, %v1286
        %v1505 = vsel %vm1497, %v1496, %v1288
        %vm1506 = vcmask 195584
        %v1507 = vsel %vm1506, %v1498, %v1306
        %v1508 = vsel %vm1506, %v1499, %v1308
        %v1509 = vsel %vm1506, %v1500, %v1310
        %v1510 = vsel %vm1506, %v1501, %v1312
        %v1511 = vsel %vm1506, %v1502, %v1314
        %v1512 = vsel %vm1506, %v1503, %v1316
        %v1513 = vsel %vm1506, %v1504, %v1318
        %v1514 = vsel %vm1506, %v1505, %v1320
        %vm1515 = vcmask 261120
        %v1516 = vsel %vm1515, %v1507, %v1338
        %v1517 = vsel %vm1515, %v1508, %v1340
        %v1518 = vsel %vm1515, %v1509, %v1342
        %v1519 = vsel %vm1515, %v1510, %v1344
        %v1520 = vsel %vm1515, %v1511, %v1346
        %v1521 = vsel %vm1515, %v1512, %v1348
        %v1522 = vsel %vm1515, %v1513, %v1350
        %v1523 = vsel %vm1515, %v1514, %v1352
        %vm1524 = vcmask 326656
        %v1525 = vsel %vm1524, %v1516, %v1370
        %v1526 = vsel %vm1524, %v1517, %v1372
        %v1527 = vsel %vm1524, %v1518, %v1374
        %v1528 = vsel %vm1524, %v1519, %v1376
        %v1529 = vsel %vm1524, %v1520, %v1378
        %v1530 = vsel %vm1524, %v1521, %v1380
        %v1531 = vsel %vm1524, %v1522, %v1382
        %v1532 = vsel %vm1524, %v1523, %v1384
        %vm1533 = vcmask 392192
        %v1534 = vsel %vm1533, %v1525, %v1402
        %v1535 = vsel %vm1533, %v1526, %v1404
        %v1536 = vsel %vm1533, %v1527, %v1406
        %v1537 = vsel %vm1533, %v1528, %v1408
        %v1538 = vsel %vm1533, %v1529, %v1410
        %v1539 = vsel %vm1533, %v1530, %v1412
        %v1540 = vsel %vm1533, %v1531, %v1414
        %v1541 = vsel %vm1533, %v1532, %v1416
        %vm1542 = vcmask 457728
        %v1543 = vsel %vm1542, %v1534, %v1434
        %v1544 = vsel %vm1542, %v1535, %v1436
        %v1545 = vsel %vm1542, %v1536, %v1438
        %v1546 = vsel %vm1542, %v1537, %v1440
        %v1547 = vsel %vm1542, %v1538, %v1442
        %v1548 = vsel %vm1542, %v1539, %v1444
        %v1549 = vsel %vm1542, %v1540, %v1446
        %v1550 = vsel %vm1542, %v1541, %v1448
        %vm1551 = vcmask 523264
        %v1552 = vsel %vm1551, %v1543, %v1466
        %v1553 = vsel %vm1551, %v1544, %v1468
        %v1554 = vsel %vm1551, %v1545, %v1470
        %v1555 = vsel %vm1551, %v1546, %v1472
        %v1556 = vsel %vm1551, %v1547, %v1474
        %v1557 = vsel %vm1551, %v1548, %v1476
        %v1558 = vsel %vm1551, %v1549, %v1478
        %v1559 = vsel %vm1551, %v1550, %v1480
        %v1560 = vld [vmem:[%s3] sm:$0xff]
        %v1561 = vld [vmem:[%s3 + $0x8] sm:$0xff]
        %v1562 = vld [vmem:[%s3 + $0x10] sm:$0xff]
        %v1563 = vld [vmem:[%s3 + $0x18] sm:$0xff]
        %v1564 = vld [vmem:[%s3 + $0x20] sm:$0xff]
        %v1565 = vld [vmem:[%s3 + $0x28] sm:$0xff]
        %v1566 = vld [vmem:[%s3 + $0x30] sm:$0xff]
        %v1567 = vld [vmem:[%s3 + $0x38] sm:$0xff]
        %v1568 = vld [vmem:[%s3 + $0x40] sm:$0xff]
        %v1569 = vld [vmem:[%s4] sm:$0x1]
        %v1571 = vperm.slane %v1569, 0
        %vm1573 = vcmask 588800
        %v1575 = vsel %vm1573, %v1552, 0
        %v1578 = vsel %vm1573, %v1553, 0
        %v1581 = vsel %vm1573, %v1554, 0
        %v1584 = vsel %vm1573, %v1555, 0
        %v1587 = vsel %vm1573, %v1556, 0
        %v1590 = vsel %vm1573, %v1557, 0
        %v1593 = vsel %vm1573, %v1558, 0
        %v1596 = vsel %vm1573, %v1559, 0
        %1598 = vmatpush.msra.mxu0 0.0
        %1599 = vmatpush.msra.mxu0 0.0
        %1600 = vmatpush.msra.mxu0 0.0
        %1601 = vmatpush.msra.mxu0 0.0
        %1602 = vmatpush.msra.mxu0 0.0
        %1603 = vmatpush.msra.mxu0 0.0
        %1604 = vmatpush.msra.mxu0 0.0
        %1605 = vmatpush.msra.mxu0 %v1568
        %1606 = vmatpush.msra.mxu0 %v1567
        %1607 = vmatpush.msra.mxu0 %v1566
        %1608 = vmatpush.msra.mxu0 %v1565
        %1609 = vmatpush.msra.mxu0 %v1564
        %1610 = vmatpush.msra.mxu0 %v1563
        %1611 = vmatpush.msra.mxu0 %v1562
        %1612 = vmatpush.msra.mxu0 %v1561
        %1613 = vmatpush.msra.mxu0 %v1560
        %1614 = vmatmul.f32.gmra.mxu0 %v1575
        %v1615 = vpop.f32.mrf.mxu0
        %v1616 = vadd.f32 %v1571, %v1615
        %1617 = vmatmul.f32.gmra.mxu0 %v1578
        %v1618 = vpop.f32.mrf.mxu0
        %v1619 = vadd.f32 %v1571, %v1618
        %1620 = vmatmul.f32.gmra.mxu0 %v1581
        %v1621 = vpop.f32.mrf.mxu0
        %v1622 = vadd.f32 %v1571, %v1621
        %1623 = vmatmul.f32.gmra.mxu0 %v1584
        %v1624 = vpop.f32.mrf.mxu0
        %v1625 = vadd.f32 %v1571, %v1624
        %1626 = vmatmul.f32.gmra.mxu0 %v1587
        %v1627 = vpop.f32.mrf.mxu0
        %v1628 = vadd.f32 %v1571, %v1627
        %1629 = vmatmul.f32.gmra.mxu0 %v1590
        %v1630 = vpop.f32.mrf.mxu0
        %v1631 = vadd.f32 %v1571, %v1630
        %1632 = vmatmul.f32.gmra.mxu0 %v1593
        %v1633 = vpop.f32.mrf.mxu0
        %v1634 = vadd.f32 %v1571, %v1633
        %1635 = vmatmul.f32.gmra.mxu0 %v1596
        %v1636 = vpop.f32.mrf.mxu0
        %v1637 = vadd.f32 %v1571, %v1636
        %1638 = vdwg.mxu0
        %v1639 = vmax.f32 %v1616, 0.0
        %v1640 = vmax.f32 %v1619, 0.0
        %v1641 = vmax.f32 %v1622, 0.0
        %v1642 = vmax.f32 %v1625, 0.0
        %v1643 = vmax.f32 %v1628, 0.0
        %v1644 = vmax.f32 %v1631, 0.0
        %v1645 = vmax.f32 %v1634, 0.0
        %v1646 = vmax.f32 %v1637, 0.0
        %1655 = vrot.lane.b32.xlu0 %v1616, 112
        %v1656 = vpop.permute.xlu0 %1655
        %1657 = vrot.lane.b32.xlu0 %v1619, 112
        %v1658 = vpop.permute.xlu0 %1657
        %1659 = vrot.lane.b32.xlu0 %v1622, 112
        %v1660 = vpop.permute.xlu0 %1659
        %1661 = vrot.lane.b32.xlu0 %v1625, 112
        %v1662 = vpop.permute.xlu0 %1661
        %1663 = vrot.lane.b32.xlu0 %v1628, 112
        %v1664 = vpop.permute.xlu0 %1663
        %1665 = vrot.lane.b32.xlu0 %v1631, 112
        %v1666 = vpop.permute.xlu0 %1665
        %1667 = vrot.lane.b32.xlu0 %v1634, 112
        %v1668 = vpop.permute.xlu0 %1667
        %1669 = vrot.lane.b32.xlu0 %v1637, 112
        %v1670 = vpop.permute.xlu0 %1669
        %v1679 = vadd.f32 %v1639, %v1656
        %v1680 = vadd.f32 %v1640, %v1658
        %v1681 = vadd.f32 %v1641, %v1660
        %v1682 = vadd.f32 %v1642, %v1662
        %v1683 = vadd.f32 %v1643, %v1664
        %v1684 = vadd.f32 %v1644, %v1666
        %v1685 = vadd.f32 %v1645, %v1668
        %v1686 = vadd.f32 %v1646, %v1670
        %1687 = vst.msk [vmem:[#allocation3] sm:$0xff] %vm1497, 0.0
        %vm1688 = vcmask 123904
        %1689 = vst.msk [vmem:[#allocation3 + $0x8] sm:$0x3] %vm1688, 0.0
        %1690 = vst.msk [vmem:[#allocation3 + $0x10] sm:$0xff] %vm1497, 0.0
        %1691 = vst.msk [vmem:[#allocation3 + $0x18] sm:$0x3] %vm1688, 0.0
        %1692 = vst.msk [vmem:[#allocation3 + $0x20] sm:$0xff] %vm1497, 0.0
        %1693 = vst.msk [vmem:[#allocation3 + $0x28] sm:$0x3] %vm1688, 0.0
        %1694 = vst.msk [vmem:[#allocation3 + $0x30] sm:$0xff] %vm1497, 0.0
        %1695 = vst.msk [vmem:[#allocation3 + $0x38] sm:$0x3] %vm1688, 0.0
        %1696 = vst.msk [vmem:[#allocation3 + $0x40] sm:$0xff] %vm1497, 0.0
        %1697 = vst.msk [vmem:[#allocation3 + $0x48] sm:$0x3] %vm1688, 0.0
        %1698 = vst.msk [vmem:[#allocation3 + $0x50] sm:$0xff] %vm1497, 0.0
        %1699 = vst.msk [vmem:[#allocation3 + $0x58] sm:$0x3] %vm1688, 0.0
        %1700 = vst.msk [vmem:[#allocation3 + $0x60] sm:$0xff] %vm1497, 0.0
        %1701 = vst.msk [vmem:[#allocation3 + $0x68] sm:$0x3] %vm1688, 0.0
        %1702 = vst.msk [vmem:[#allocation3 + $0x70] sm:$0xff] %vm1497, 0.0
        %1703 = vst.msk [vmem:[#allocation3 + $0x78] sm:$0x3] %vm1688, 0.0
        %1704 = vst.msk [vmem:[#allocation3 + $0x80] sm:$0xff] %vm1497, 0.0
        %1705 = vst.msk [vmem:[#allocation3 + $0x88] sm:$0x3] %vm1688, 0.0
        %1706 = vst.msk [vmem:[#allocation3 + $0x90] sm:$0xff] %vm1497, 0.0
        %1707 = vst.msk [vmem:[#allocation3 + $0x98] sm:$0x3] %vm1688, 0.0
        %s1708 = scalar_lea.vmem [#allocation3], 16
        %1709 = vst.msk [vmem:[%s1708 + $0x1] sm:$0xff] %vm1497, %v1679
        %1710 = vst.msk [vmem:[%s1708 + $0x11] sm:$0xff] %vm1497, %v1680
        %1711 = vst.msk [vmem:[%s1708 + $0x21] sm:$0xff] %vm1497, %v1681
        %1712 = vst.msk [vmem:[%s1708 + $0x31] sm:$0xff] %vm1497, %v1682
        %1713 = vst.msk [vmem:[%s1708 + $0x41] sm:$0xff] %vm1497, %v1683
        %1714 = vst.msk [vmem:[%s1708 + $0x51] sm:$0xff] %vm1497, %v1684
        %1715 = vst.msk [vmem:[%s1708 + $0x61] sm:$0xff] %vm1497, %v1685
        %1716 = vst.msk [vmem:[%s1708 + $0x71] sm:$0xff] %vm1497, %v1686
        %v1717 = vld [vmem:[#allocation3] ss:$2 sm:$0xf]
        %s1718 = scalar_lea.vmem [#allocation3], 32
        %v1719 = vld [vmem:[%s1718] ss:$2 sm:$0xf]
        %s1720 = scalar_lea.vmem [#allocation3], 64
        %v1721 = vld [vmem:[%s1720] ss:$2 sm:$0xf]
        %s1722 = scalar_lea.vmem [#allocation3], 96
        %v1723 = vld [vmem:[%s1722] ss:$2 sm:$0xf]
        %s1724 = scalar_lea.vmem [#allocation3], 1
        %v1725 = vld [vmem:[%s1724] ss:$2 sm:$0xf]
        %s1726 = scalar_lea.vmem [#allocation3], 33
        %v1727 = vld [vmem:[%s1726] ss:$2 sm:$0xf]
        %s1728 = scalar_lea.vmem [#allocation3], 65
        %v1729 = vld [vmem:[%s1728] ss:$2 sm:$0xf]
        %s1730 = scalar_lea.vmem [#allocation3], 97
        %v1731 = vld [vmem:[%s1730] ss:$2 sm:$0xf]
        %s1732 = scalar_lea.vmem [#allocation3], 2
        %v1733 = vld [vmem:[%s1732] ss:$2 sm:$0xf]
        %s1734 = scalar_lea.vmem [#allocation3], 34
        %v1735 = vld [vmem:[%s1734] ss:$2 sm:$0xf]
        %s1736 = scalar_lea.vmem [#allocation3], 66
        %v1737 = vld [vmem:[%s1736] ss:$2 sm:$0xf]
        %s1738 = scalar_lea.vmem [#allocation3], 98
        %v1739 = vld [vmem:[%s1738] ss:$2 sm:$0xf]
        %v1740 = vld [vmem:[%s1708] ss:$2 sm:$0xf]
        %s1741 = scalar_lea.vmem %s1708, 32 [#allocation3]
        %v1742 = vld [vmem:[%s1741] ss:$2 sm:$0xf]
        %s1743 = scalar_lea.vmem %s1708, 64 [#allocation3]
        %v1744 = vld [vmem:[%s1743] ss:$2 sm:$0xf]
        %s1745 = scalar_lea.vmem %s1708, 96 [#allocation3]
        %v1746 = vld [vmem:[%s1745] ss:$2 sm:$0xf]
        %s1747 = scalar_lea.vmem %s1708, 1 [#allocation3]
        %v1748 = vld [vmem:[%s1747] ss:$2 sm:$0xf]
        %s1749 = scalar_lea.vmem %s1708, 33 [#allocation3]
        %v1750 = vld [vmem:[%s1749] ss:$2 sm:$0xf]
        %s1751 = scalar_lea.vmem %s1708, 65 [#allocation3]
        %v1752 = vld [vmem:[%s1751] ss:$2 sm:$0xf]
        %s1753 = scalar_lea.vmem %s1708, 97 [#allocation3]
        %v1754 = vld [vmem:[%s1753] ss:$2 sm:$0xf]
        %s1755 = scalar_lea.vmem %s1708, 2 [#allocation3]
        %v1756 = vld [vmem:[%s1755] ss:$2 sm:$0xf]
        %s1757 = scalar_lea.vmem %s1708, 34 [#allocation3]
        %v1758 = vld [vmem:[%s1757] ss:$2 sm:$0xf]
        %s1759 = scalar_lea.vmem %s1708, 66 [#allocation3]
        %v1760 = vld [vmem:[%s1759] ss:$2 sm:$0xf]
        %s1761 = scalar_lea.vmem %s1708, 98 [#allocation3]
        %v1762 = vld [vmem:[%s1761] ss:$2 sm:$0xf]
        %s1763 = scalar_lea.vmem [#allocation3], 32
        %v1764 = vld [vmem:[%s1763] ss:$2 sm:$0xf]
        %s1765 = scalar_lea.vmem %s1763, 32 [#allocation3]
        %v1766 = vld [vmem:[%s1765] ss:$2 sm:$0xf]
        %s1767 = scalar_lea.vmem %s1763, 64 [#allocation3]
        %v1768 = vld [vmem:[%s1767] ss:$2 sm:$0xf]
        %s1769 = scalar_lea.vmem %s1763, 96 [#allocation3]
        %v1770 = vld [vmem:[%s1769] ss:$2 sm:$0xf]
        %s1771 = scalar_lea.vmem %s1763, 1 [#allocation3]
        %v1772 = vld [vmem:[%s1771] ss:$2 sm:$0xf]
        %s1773 = scalar_lea.vmem %s1763, 33 [#allocation3]
        %v1774 = vld [vmem:[%s1773] ss:$2 sm:$0xf]
        %s1775 = scalar_lea.vmem %s1763, 65 [#allocation3]
        %v1776 = vld [vmem:[%s1775] ss:$2 sm:$0xf]
        %s1777 = scalar_lea.vmem %s1763, 97 [#allocation3]
        %v1778 = vld [vmem:[%s1777] ss:$2 sm:$0xf]
        %s1779 = scalar_lea.vmem %s1763, 2 [#allocation3]
        %v1780 = vld [vmem:[%s1779] ss:$2 sm:$0xf]
        %s1781 = scalar_lea.vmem %s1763, 34 [#allocation3]
        %v1782 = vld [vmem:[%s1781] ss:$2 sm:$0xf]
        %s1783 = scalar_lea.vmem %s1763, 66 [#allocation3]
        %v1784 = vld [vmem:[%s1783] ss:$2 sm:$0xf]
        %s1785 = scalar_lea.vmem %s1763, 98 [#allocation3]
        %v1786 = vld [vmem:[%s1785] ss:$2 sm:$0xf]
        %1791 = vst [vmem:[#allocation1] ss:$2 sm:$0xff] %v1717
        %s1792 = scalar_lea.vmem [#allocation1], 1
        %1793 = vst [vmem:[%s1792] ss:$2 sm:$0xff] %v1719
        %s1794 = scalar_lea.vmem [#allocation1], 16
        %1795 = vst [vmem:[%s1794] ss:$2 sm:$0xff] %v1721
        %s1796 = scalar_lea.vmem [#allocation1], 17
        %1797 = vst [vmem:[%s1796] ss:$2 sm:$0xff] %v1723
        %v1798 = vld.sshfl [vmem:[#allocation1] sm:$0xff pattern:$0x75316420]
        %v1799 = vld.sshfl [vmem:[#allocation1 + $0x10] sm:$0xff pattern:$0x75316420]
        %1806 = vst [vmem:[#allocation1] ss:$2 sm:$0xff] %v1725
        %s1807 = scalar_lea.vmem [#allocation1], 1
        %1808 = vst [vmem:[%s1807] ss:$2 sm:$0xff] %v1727
        %s1809 = scalar_lea.vmem [#allocation1], 16
        %1810 = vst [vmem:[%s1809] ss:$2 sm:$0xff] %v1729
        %s1811 = scalar_lea.vmem [#allocation1], 17
        %1812 = vst [vmem:[%s1811] ss:$2 sm:$0xff] %v1731
        %v1813 = vld.sshfl [vmem:[#allocation1] sm:$0xff pattern:$0x75316420]
        %v1814 = vld.sshfl [vmem:[#allocation1 + $0x10] sm:$0xff pattern:$0x75316420]
        %1815 = vrot.lane.b32.xlu0 %v1813, 16
        %v1816 = vpop.permute.xlu0 %1815
        %1817 = vrot.lane.b32.xlu0 %v1814, 16
        %v1818 = vpop.permute.xlu0 %1817
        %1825 = vst [vmem:[#allocation1] ss:$2 sm:$0xff] %v1733
        %s1826 = scalar_lea.vmem [#allocation1], 1
        %1827 = vst [vmem:[%s1826] ss:$2 sm:$0xff] %v1735
        %s1828 = scalar_lea.vmem [#allocation1], 16
        %1829 = vst [vmem:[%s1828] ss:$2 sm:$0xff] %v1737
        %s1830 = scalar_lea.vmem [#allocation1], 17
        %1831 = vst [vmem:[%s1830] ss:$2 sm:$0xff] %v1739
        %v1832 = vld.sshfl [vmem:[#allocation1] sm:$0xff pattern:$0x75316420]
        %v1833 = vld.sshfl [vmem:[#allocation1 + $0x10] sm:$0xff pattern:$0x75316420]
        %1834 = vrot.lane.b32.xlu0 %v1832, 32
        %v1835 = vpop.permute.xlu0 %1834
        %1836 = vrot.lane.b32.xlu0 %v1833, 32
        %v1837 = vpop.permute.xlu0 %1836
        %1844 = vst [vmem:[#allocation1] ss:$2 sm:$0xff] %v1740
        %s1845 = scalar_lea.vmem [#allocation1], 1
        %1846 = vst [vmem:[%s1845] ss:$2 sm:$0xff] %v1742
        %s1847 = scalar_lea.vmem [#allocation1], 16
        %1848 = vst [vmem:[%s1847] ss:$2 sm:$0xff] %v1744
        %s1849 = scalar_lea.vmem [#allocation1], 17
        %1850 = vst [vmem:[%s1849] ss:$2 sm:$0xff] %v1746
        %v1851 = vld.sshfl [vmem:[#allocation1] sm:$0xff pattern:$0x75316420]
        %v1852 = vld.sshfl [vmem:[#allocation1 + $0x10] sm:$0xff pattern:$0x75316420]
        %1853 = vrot.lane.b32.xlu0 %v1851, 48
        %v1854 = vpop.permute.xlu0 %1853
        %1855 = vrot.lane.b32.xlu0 %v1852, 48
        %v1856 = vpop.permute.xlu0 %1855
        %1863 = vst [vmem:[#allocation1] ss:$2 sm:$0xff] %v1748
        %s1864 = scalar_lea.vmem [#allocation1], 1
        %1865 = vst [vmem:[%s1864] ss:$2 sm:$0xff] %v1750
        %s1866 = scalar_lea.vmem [#allocation1], 16
        %1867 = vst [vmem:[%s1866] ss:$2 sm:$0xff] %v1752
        %s1868 = scalar_lea.vmem [#allocation1], 17
        %1869 = vst [vmem:[%s1868] ss:$2 sm:$0xff] %v1754
        %v1870 = vld.sshfl [vmem:[#allocation1] sm:$0xff pattern:$0x75316420]
        %v1871 = vld.sshfl [vmem:[#allocation1 + $0x10] sm:$0xff pattern:$0x75316420]
        %1872 = vrot.lane.b32.xlu0 %v1870, 64
        %v1873 = vpop.permute.xlu0 %1872
        %1874 = vrot.lane.b32.xlu0 %v1871, 64
        %v1875 = vpop.permute.xlu0 %1874
        %1882 = vst [vmem:[#allocation1] ss:$2 sm:$0xff] %v1756
        %s1883 = scalar_lea.vmem [#allocation1], 1
        %1884 = vst [vmem:[%s1883] ss:$2 sm:$0xff] %v1758
        %s1885 = scalar_lea.vmem [#allocation1], 16
        %1886 = vst [vmem:[%s1885] ss:$2 sm:$0xff] %v1760
        %s1887 = scalar_lea.vmem [#allocation1], 17
        %1888 = vst [vmem:[%s1887] ss:$2 sm:$0xff] %v1762
        %v1889 = vld.sshfl [vmem:[#allocation1] sm:$0xff pattern:$0x75316420]
        %v1890 = vld.sshfl [vmem:[#allocation1 + $0x10] sm:$0xff pattern:$0x75316420]
        %1891 = vrot.lane.b32.xlu0 %v1889, 80
        %v1892 = vpop.permute.xlu0 %1891
        %1893 = vrot.lane.b32.xlu0 %v1890, 80
        %v1894 = vpop.permute.xlu0 %1893
        %1901 = vst [vmem:[#allocation1] ss:$2 sm:$0xff] %v1764
        %s1902 = scalar_lea.vmem [#allocation1], 1
        %1903 = vst [vmem:[%s1902] ss:$2 sm:$0xff] %v1766
        %s1904 = scalar_lea.vmem [#allocation1], 16
        %1905 = vst [vmem:[%s1904] ss:$2 sm:$0xff] %v1768
        %s1906 = scalar_lea.vmem [#allocation1], 17
        %1907 = vst [vmem:[%s1906] ss:$2 sm:$0xff] %v1770
        %v1908 = vld.sshfl [vmem:[#allocation1] sm:$0xff pattern:$0x75316420]
        %v1909 = vld.sshfl [vmem:[#allocation1 + $0x10] sm:$0xff pattern:$0x75316420]
        %1910 = vrot.lane.b32.xlu0 %v1908, 96
        %v1911 = vpop.permute.xlu0 %1910
        %1912 = vrot.lane.b32.xlu0 %v1909, 96
        %v1913 = vpop.permute.xlu0 %1912
        %1920 = vst [vmem:[#allocation1] ss:$2 sm:$0xff] %v1772
        %s1921 = scalar_lea.vmem [#allocation1], 1
        %1922 = vst [vmem:[%s1921] ss:$2 sm:$0xff] %v1774
        %s1923 = scalar_lea.vmem [#allocation1], 16
        %1924 = vst [vmem:[%s1923] ss:$2 sm:$0xff] %v1776
        %s1925 = scalar_lea.vmem [#allocation1], 17
        %1926 = vst [vmem:[%s1925] ss:$2 sm:$0xff] %v1778
        %v1927 = vld.sshfl [vmem:[#allocation1] sm:$0xff pattern:$0x75316420]
        %v1928 = vld.sshfl [vmem:[#allocation1 + $0x10] sm:$0xff pattern:$0x75316420]
        %1929 = vrot.lane.b32.xlu0 %v1927, 112
        %v1930 = vpop.permute.xlu0 %1929
        %1931 = vrot.lane.b32.xlu0 %v1928, 112
        %v1932 = vpop.permute.xlu0 %1931
        %1939 = vst [vmem:[#allocation1] ss:$2 sm:$0xff] %v1780
        %s1940 = scalar_lea.vmem [#allocation1], 1
        %1941 = vst [vmem:[%s1940] ss:$2 sm:$0xff] %v1782
        %s1942 = scalar_lea.vmem [#allocation1], 16
        %1943 = vst [vmem:[%s1942] ss:$2 sm:$0xff] %v1784
        %s1944 = scalar_lea.vmem [#allocation1], 17
        %1945 = vst [vmem:[%s1944] ss:$2 sm:$0xff] %v1786
        %v1946 = vld.sshfl [vmem:[#allocation1] sm:$0xff pattern:$0x75316420]
        %v1947 = vld.sshfl [vmem:[#allocation1 + $0x10] sm:$0xff pattern:$0x75316420]
        %v1948 = vsel %vm1497, %v1798, %v1816
        %v1949 = vsel %vm1497, %v1799, %v1818
        %v1950 = vsel %vm1515, %v1948, %v1835
        %v1951 = vsel %vm1515, %v1949, %v1837
        %v1952 = vsel %vm1533, %v1950, %v1854
        %v1953 = vsel %vm1533, %v1951, %v1856
        %v1954 = vsel %vm1551, %v1952, %v1873
        %v1955 = vsel %vm1551, %v1953, %v1875
        %vm1956 = vcmask 654336
        %v1957 = vsel %vm1956, %v1954, %v1892
        %v1958 = vsel %vm1956, %v1955, %v1894
        %vm1959 = vcmask 785408
        %v1960 = vsel %vm1959, %v1957, %v1911
        %v1961 = vsel %vm1959, %v1958, %v1913
        %vm1962 = vcmask 916480
        %v1963 = vsel %vm1962, %v1960, %v1930
        %v1964 = vsel %vm1962, %v1961, %v1932
        %v1965 = vld [vmem:[%s5] sm:$0xff]
        %v1966 = vld [vmem:[%s5 + $0x8] sm:$0xff]
        %v1967 = vld [vmem:[%s5 + $0x10] sm:$0xff]
        %v1968 = vld [vmem:[%s5 + $0x18] sm:$0xff]
        %v1969 = vld [vmem:[%s5 + $0x20] sm:$0xff]
        %v1970 = vld [vmem:[%s5 + $0x28] sm:$0xff]
        %v1971 = vld [vmem:[%s5 + $0x30] sm:$0xff]
        %v1972 = vld [vmem:[%s5 + $0x38] sm:$0xff]
        %v1973 = vld [vmem:[%s5 + $0x40] sm:$0xff]
        %v1974 = vld [vmem:[%s5 + $0x48] sm:$0xff]
        %v1975 = vld [vmem:[%s5 + $0x50] sm:$0xff]
        %v1976 = vld [vmem:[%s5 + $0x58] sm:$0xff]
        %v1977 = vld [vmem:[%s5 + $0x60] sm:$0xff]
        %v1978 = vld [vmem:[%s5 + $0x68] sm:$0xff]
        %v1979 = vld [vmem:[%s5 + $0x70] sm:$0xff]
        %v1980 = vld [vmem:[%s5 + $0x78] sm:$0xff]
        %v1981 = vld [vmem:[%s5 + $0x80] sm:$0xff]
        %v1982 = vld [vmem:[%s5 + $0x88] sm:$0xff]
        %v1983 = vld [vmem:[%s6] sm:$0x1]
        %v1985 = vperm.slane %v1983, 0
        %v1987 = vsel %vm1497, %v1946, 0
        %v1989 = vsel %vm1497, %v1947, 0
        %1991 = vmatpush.msra.mxu0 %v1980
        %1992 = vmatpush.msra.mxu0 %v1979
        %1993 = vmatpush.msra.mxu0 %v1978
        %1994 = vmatpush.msra.mxu0 %v1977
        %1995 = vmatpush.msra.mxu0 %v1976
        %1996 = vmatpush.msra.mxu0 %v1975
        %1997 = vmatpush.msra.mxu0 %v1974
        %1998 = vmatpush.msra.mxu0 %v1973
        %1999 = vmatpush.msra.mxu0 %v1972
        %2000 = vmatpush.msra.mxu0 %v1971
        %2001 = vmatpush.msra.mxu0 %v1970
        %2002 = vmatpush.msra.mxu0 %v1969
        %2003 = vmatpush.msra.mxu0 %v1968
        %2004 = vmatpush.msra.mxu0 %v1967
        %2005 = vmatpush.msra.mxu0 %v1966
        %2006 = vmatpush.msra.mxu0 %v1965
        %2007 = vmatmul.f32.gmra.mxu0 %v1963
        %v2008 = vpop.f32.mrf.mxu0
        %v2009 = vadd.f32 %v1985, %v2008
        %2010 = vmatmul.f32.gmra.mxu0 %v1964
        %v2011 = vpop.f32.mrf.mxu0
        %v2012 = vadd.f32 %v1985, %v2011
        %2013 = vdwg.mxu0
        %2014 = vmatpush.msra.mxu0 0.0
        %2015 = vmatpush.msra.mxu0 0.0
        %2016 = vmatpush.msra.mxu0 0.0
        %2017 = vmatpush.msra.mxu0 0.0
        %2018 = vmatpush.msra.mxu0 0.0
        %2019 = vmatpush.msra.mxu0 0.0
        %2020 = vmatpush.msra.mxu0 0.0
        %2021 = vmatpush.msra.mxu0 0.0
        %2022 = vmatpush.msra.mxu0 0.0
        %2023 = vmatpush.msra.mxu0 0.0
        %2024 = vmatpush.msra.mxu0 0.0
        %2025 = vmatpush.msra.mxu0 0.0
        %2026 = vmatpush.msra.mxu0 0.0
        %2027 = vmatpush.msra.mxu0 0.0
        %2028 = vmatpush.msra.mxu0 %v1982
        %2029 = vmatpush.msra.mxu0 %v1981
        %2030 = vmatmul.f32.gmra.mxu0 %v1987
        %v2031 = vpop.f32.mrf.mxu0
        %v2032 = vadd.f32 %v2009, %v2031
        %2033 = vmatmul.f32.gmra.mxu0 %v1989
        %v2034 = vpop.f32.mrf.mxu0
        %v2035 = vadd.f32 %v2012, %v2034
        %2036 = vdwg.mxu0
        %v2037 = vmax.f32 %v2032, 0.0
        %v2038 = vmax.f32 %v2035, 0.0
        %2041 = vrot.lane.b32.xlu0 %v2032, 96
        %v2042 = vpop.permute.xlu0 %2041
        %2043 = vrot.lane.b32.xlu0 %v2035, 96
        %v2044 = vpop.permute.xlu0 %2043
        %v2047 = vadd.f32 %v2037, %v2042
        %v2048 = vadd.f32 %v2038, %v2044
        %v2051 = vrot.slane %v2047, 4
        %v2052 = vrot.slane %v2048, 4
        %vm2055 = vcmask 259072
        %2056 = vst.msk [vmem:[#allocation4] sm:$0x3f] %vm2055, 0.0
        %2057 = vst.msk [vmem:[#allocation4 + $0x8] sm:$0x3f] %vm2055, 0.0
        %2058 = vst.msk [vmem:[#allocation4 + $0x10] sm:$0x3f] %vm2055, 0.0
        %2059 = vst.msk [vmem:[#allocation4 + $0x18] sm:$0x3f] %vm2055, 0.0
        %2060 = vst.msk [vmem:[#allocation4 + $0x20] sm:$0x3f] %vm2055, 0.0
        %2061 = vst.msk [vmem:[#allocation4 + $0x28] sm:$0x3f] %vm2055, 0.0
        %s2062 = scalar_lea.vmem [#allocation4], 8
        %vm2063 = vcmask 257024
        %2064 = vst.msk [vmem:[%s2062 + $0x1] sm:$0xf] %vm2063, %v2047
        %2065 = vst.msk [vmem:[%s2062 + $0x9] sm:$0xf] %vm2063, %v2051
        %2066 = vst.msk [vmem:[%s2062 + $0x11] sm:$0xf] %vm2063, %v2048
        %2067 = vst.msk [vmem:[%s2062 + $0x19] sm:$0xf] %vm2063, %v2052
        %v2068 = vld [vmem:[#allocation4] ss:$2 sm:$0x3]
        %s2069 = scalar_lea.vmem [#allocation4], 16
        %v2070 = vld [vmem:[%s2069] ss:$2 sm:$0x3]
        %s2071 = scalar_lea.vmem [#allocation4], 1
        %v2072 = vld [vmem:[%s2071] ss:$2 sm:$0x3]
        %s2073 = scalar_lea.vmem [#allocation4], 17
        %v2074 = vld [vmem:[%s2073] ss:$2 sm:$0x3]
        %s2075 = scalar_lea.vmem [#allocation4], 2
        %v2076 = vld [vmem:[%s2075] ss:$2 sm:$0x3]
        %s2077 = scalar_lea.vmem [#allocation4], 18
        %v2078 = vld [vmem:[%s2077] ss:$2 sm:$0x3]
        %v2079 = vld [vmem:[%s2062] ss:$2 sm:$0x3]
        %s2080 = scalar_lea.vmem %s2062, 16 [#allocation4]
        %v2081 = vld [vmem:[%s2080] ss:$2 sm:$0x3]
        %s2082 = scalar_lea.vmem %s2062, 1 [#allocation4]
        %v2083 = vld [vmem:[%s2082] ss:$2 sm:$0x3]
        %s2084 = scalar_lea.vmem %s2062, 17 [#allocation4]
        %v2085 = vld [vmem:[%s2084] ss:$2 sm:$0x3]
        %s2086 = scalar_lea.vmem %s2062, 2 [#allocation4]
        %v2087 = vld [vmem:[%s2086] ss:$2 sm:$0x3]
        %s2088 = scalar_lea.vmem %s2062, 18 [#allocation4]
        %v2089 = vld [vmem:[%s2088] ss:$2 sm:$0x3]
        %s2090 = scalar_lea.vmem [#allocation4], 16
        %v2091 = vld [vmem:[%s2090] ss:$2 sm:$0x3]
        %s2092 = scalar_lea.vmem %s2090, 16 [#allocation4]
        %v2093 = vld [vmem:[%s2092] ss:$2 sm:$0x3]
        %s2094 = scalar_lea.vmem %s2090, 1 [#allocation4]
        %v2095 = vld [vmem:[%s2094] ss:$2 sm:$0x3]
        %s2096 = scalar_lea.vmem %s2090, 17 [#allocation4]
        %v2097 = vld [vmem:[%s2096] ss:$2 sm:$0x3]
        %s2098 = scalar_lea.vmem %s2090, 2 [#allocation4]
        %v2099 = vld [vmem:[%s2098] ss:$2 sm:$0x3]
        %s2100 = scalar_lea.vmem %s2090, 18 [#allocation4]
        %v2101 = vld [vmem:[%s2100] ss:$2 sm:$0x3]
        %2104 = vst [vmem:[#allocation1] ss:$4 sm:$0xff] %v2068
        %s2105 = scalar_lea.vmem [#allocation1], 1
        %2106 = vst [vmem:[%s2105] ss:$4 sm:$0xff] %v2070
        %v2107 = vld.sshfl [vmem:[#allocation1] sm:$0xff pattern:$0x73625140]
        %2111 = vst [vmem:[#allocation1] ss:$4 sm:$0xff] %v2072
        %s2112 = scalar_lea.vmem [#allocation1], 1
        %2113 = vst [vmem:[%s2112] ss:$4 sm:$0xff] %v2074
        %v2114 = vld.sshfl [vmem:[#allocation1] sm:$0xff pattern:$0x73625140]
        %2115 = vrot.lane.b32.xlu0 %v2114, 32
        %v2116 = vpop.permute.xlu0 %2115
        %2120 = vst [vmem:[#allocation1] ss:$4 sm:$0xff] %v2076
        %s2121 = scalar_lea.vmem [#allocation1], 1
        %2122 = vst [vmem:[%s2121] ss:$4 sm:$0xff] %v2078
        %v2123 = vld.sshfl [vmem:[#allocation1] sm:$0xff pattern:$0x73625140]
        %2124 = vrot.lane.b32.xlu0 %v2123, 64
        %v2125 = vpop.permute.xlu0 %2124
        %2129 = vst [vmem:[#allocation1] ss:$4 sm:$0xff] %v2079
        %s2130 = scalar_lea.vmem [#allocation1], 1
        %2131 = vst [vmem:[%s2130] ss:$4 sm:$0xff] %v2081
        %v2132 = vld.sshfl [vmem:[#allocation1] sm:$0xff pattern:$0x73625140]
        %2133 = vrot.lane.b32.xlu0 %v2132, 96
        %v2134 = vpop.permute.xlu0 %2133
        %2138 = vst [vmem:[#allocation1] ss:$4 sm:$0xff] %v2083
        %s2139 = scalar_lea.vmem [#allocation1], 1
        %2140 = vst [vmem:[%s2139] ss:$4 sm:$0xff] %v2085
        %v2141 = vld.sshfl [vmem:[#allocation1] sm:$0xff pattern:$0x73625140]
        %2145 = vst [vmem:[#allocation1] ss:$4 sm:$0xff] %v2087
        %s2146 = scalar_lea.vmem [#allocation1], 1
        %2147 = vst [vmem:[%s2146] ss:$4 sm:$0xff] %v2089
        %v2148 = vld.sshfl [vmem:[#allocation1] sm:$0xff pattern:$0x73625140]
        %2149 = vrot.lane.b32.xlu0 %v2148, 32
        %v2150 = vpop.permute.xlu0 %2149
        %2154 = vst [vmem:[#allocation1] ss:$4 sm:$0xff] %v2091
        %s2155 = scalar_lea.vmem [#allocation1], 1
        %2156 = vst [vmem:[%s2155] ss:$4 sm:$0xff] %v2093
        %v2157 = vld.sshfl [vmem:[#allocation1] sm:$0xff pattern:$0x73625140]
        %2158 = vrot.lane.b32.xlu0 %v2157, 64
        %v2159 = vpop.permute.xlu0 %2158
        %2163 = vst [vmem:[#allocation1] ss:$4 sm:$0xff] %v2095
        %s2164 = scalar_lea.vmem [#allocation1], 1
        %2165 = vst [vmem:[%s2164] ss:$4 sm:$0xff] %v2097
        %v2166 = vld.sshfl [vmem:[#allocation1] sm:$0xff pattern:$0x73625140]
        %2167 = vrot.lane.b32.xlu0 %v2166, 96
        %v2168 = vpop.permute.xlu0 %2167
        %2172 = vst [vmem:[#allocation1] ss:$4 sm:$0xff] %v2099
        %s2173 = scalar_lea.vmem [#allocation1], 1
        %2174 = vst [vmem:[%s2173] ss:$4 sm:$0xff] %v2101
        %v2175 = vld.sshfl [vmem:[#allocation1] sm:$0xff pattern:$0x73625140]
        %v2176 = vsel %vm1515, %v2107, %v2116
        %v2177 = vsel %vm1551, %v2176, %v2125
        %v2178 = vsel %vm1959, %v2177, %v2134
        %v2179 = vsel %vm1515, %v2141, %v2150
        %v2180 = vsel %vm1551, %v2179, %v2159
        %v2181 = vsel %vm1959, %v2180, %v2168
        %v2182 = vld [vmem:[%s7] sm:$0xff]
        %v2183 = vld [vmem:[%s7 + $0x8] sm:$0xff]
        %v2184 = vld [vmem:[%s7 + $0x10] sm:$0xff]
        %v2185 = vld [vmem:[%s7 + $0x18] sm:$0xff]
        %v2186 = vld [vmem:[%s7 + $0x20] sm:$0xff]
        %v2187 = vld [vmem:[%s7 + $0x28] sm:$0xff]
        %v2188 = vld [vmem:[%s7 + $0x30] sm:$0xff]
        %v2189 = vld [vmem:[%s7 + $0x38] sm:$0xff]
        %v2190 = vld [vmem:[%s7 + $0x40] sm:$0xff]
        %v2191 = vld [vmem:[%s7 + $0x48] sm:$0xff]
        %v2192 = vld [vmem:[%s7 + $0x50] sm:$0xff]
        %v2193 = vld [vmem:[%s7 + $0x58] sm:$0xff]
        %v2194 = vld [vmem:[%s7 + $0x60] sm:$0xff]
        %v2195 = vld [vmem:[%s7 + $0x68] sm:$0xff]
        %v2196 = vld [vmem:[%s7 + $0x70] sm:$0xff]
        %v2197 = vld [vmem:[%s7 + $0x78] sm:$0xff]
        %v2198 = vld [vmem:[%s7 + $0x80] sm:$0xff]
        %v2199 = vld [vmem:[%s7 + $0x88] sm:$0xff]
        %v2200 = vld [vmem:[%s7 + $0x90] sm:$0xff]
        %v2201 = vld [vmem:[%s7 + $0x98] sm:$0xff]
        %v2202 = vld [vmem:[%s7 + $0xa0] sm:$0xff]
        %v2203 = vld [vmem:[%s7 + $0xa8] sm:$0xff]
        %v2204 = vld [vmem:[%s7 + $0xb0] sm:$0xff]
        %v2205 = vld [vmem:[%s7 + $0xb8] sm:$0xff]
        %v2206 = vld [vmem:[%s7 + $0xc0] sm:$0xff]
        %v2207 = vld [vmem:[%s7 + $0xc8] sm:$0xff]
        %v2208 = vld [vmem:[%s7 + $0xd0] sm:$0xff]
        %v2209 = vld [vmem:[%s7 + $0xd8] sm:$0xff]
        %v2210 = vld [vmem:[%s7 + $0xe0] sm:$0xff]
        %v2211 = vld [vmem:[%s7 + $0xe8] sm:$0xff]
        %v2212 = vld [vmem:[%s7 + $0xf0] sm:$0xff]
        %v2213 = vld [vmem:[%s7 + $0xf8] sm:$0xff]
        %v2214 = vld [vmem:[%s7 + $0x100] sm:$0xff]
        %v2215 = vld [vmem:[%s7 + $0x108] sm:$0xff]
        %v2216 = vld [vmem:[%s7 + $0x110] sm:$0xff]
        %v2217 = vld [vmem:[%s7 + $0x118] sm:$0xff]
        %v2218 = vld [vmem:[%s8] sm:$0x1]
        %v2220 = vperm.slane %v2218, 0
        %v2222 = vsel %vm1515, %v2175, 0
        %2224 = vmatpush.msra.mxu0 %v2197
        %2225 = vmatpush.msra.mxu0 %v2196
        %2226 = vmatpush.msra.mxu0 %v2195
        %2227 = vmatpush.msra.mxu0 %v2194
        %2228 = vmatpush.msra.mxu0 %v2193
        %2229 = vmatpush.msra.mxu0 %v2192
        %2230 = vmatpush.msra.mxu0 %v2191
        %2231 = vmatpush.msra.mxu0 %v2190
        %2232 = vmatpush.msra.mxu0 %v2189
        %2233 = vmatpush.msra.mxu0 %v2188
        %2234 = vmatpush.msra.mxu0 %v2187
        %2235 = vmatpush.msra.mxu0 %v2186
        %2236 = vmatpush.msra.mxu0 %v2185
        %2237 = vmatpush.msra.mxu0 %v2184
        %2238 = vmatpush.msra.mxu0 %v2183
        %2239 = vmatpush.msra.mxu0 %v2182
        %2240 = vmatmul.f32.gmra.mxu0 %v2178
        %v2241 = vpop.f32.mrf.mxu0
        %v2242 = vadd.f32 %v2220, %v2241
        %2243 = vdwg.mxu0
        %2244 = vmatpush.msra.mxu0 %v2213
        %2245 = vmatpush.msra.mxu0 %v2212
        %2246 = vmatpush.msra.mxu0 %v2211
        %2247 = vmatpush.msra.mxu0 %v2210
        %2248 = vmatpush.msra.mxu0 %v2209
        %2249 = vmatpush.msra.mxu0 %v2208
        %2250 = vmatpush.msra.mxu0 %v2207
        %2251 = vmatpush.msra.mxu0 %v2206
        %2252 = vmatpush.msra.mxu0 %v2205
        %2253 = vmatpush.msra.mxu0 %v2204
        %2254 = vmatpush.msra.mxu0 %v2203
        %2255 = vmatpush.msra.mxu0 %v2202
        %2256 = vmatpush.msra.mxu0 %v2201
        %2257 = vmatpush.msra.mxu0 %v2200
        %2258 = vmatpush.msra.mxu0 %v2199
        %2259 = vmatpush.msra.mxu0 %v2198
        %2260 = vmatmul.f32.gmra.mxu0 %v2181
        %v2261 = vpop.f32.mrf.mxu0
        %v2262 = vadd.f32 %v2242, %v2261
        %2263 = vdwg.mxu0
        %2264 = vmatpush.msra.mxu0 0.0
        %2265 = vmatpush.msra.mxu0 0.0
        %2266 = vmatpush.msra.mxu0 0.0
        %2267 = vmatpush.msra.mxu0 0.0
        %2268 = vmatpush.msra.mxu0 0.0
        %2269 = vmatpush.msra.mxu0 0.0
        %2270 = vmatpush.msra.mxu0 0.0
        %2271 = vmatpush.msra.mxu0 0.0
        %2272 = vmatpush.msra.mxu0 0.0
        %2273 = vmatpush.msra.mxu0 0.0
        %2274 = vmatpush.msra.mxu0 0.0
        %2275 = vmatpush.msra.mxu0 0.0
        %2276 = vmatpush.msra.mxu0 %v2217
        %2277 = vmatpush.msra.mxu0 %v2216
        %2278 = vmatpush.msra.mxu0 %v2215
        %2279 = vmatpush.msra.mxu0 %v2214
        %2280 = vmatmul.f32.gmra.mxu0 %v2222
        %v2281 = vpop.f32.mrf.mxu0
        %v2282 = vadd.f32 %v2262, %v2281
        %2283 = vdwg.mxu0
        %v2284 = vmax.f32 %v2282, 0.0
        %2286 = vrot.lane.b32.xlu0 %v2282, 64
        %v2287 = vpop.permute.xlu0 %2286
        %v2289 = vadd.f32 %v2284, %v2287
        %vm2290 = vcmask 519168
        %v2291 = vsel %vm2290, %v2289, 0.0
        %v2292 = vrot.slane %v2291, 4
        %v2293 = vadd.f32 %v2291, %v2292
        %v2294 = vrot.slane %v2293, 2
        %v2295 = vadd.f32 %v2293, %v2294
        %v2296 = vrot.slane %v2295, 1
        %v2297 = vadd.f32 %v2295, %v2296
        %v2298 = vrcp.pop 4.0
        %v2299 = vmul.f32 4.0, %v2298
        %v2300 = vsub.f32 1.0, %v2299
        %v2301 = vmul.f32 %v2298, %v2300
        %v2302 = vadd.f32 %v2298, %v2301
        %vm2303 = vweird.f32 %v2298
        %v2304 = vsel %vm2303, %v2298, %v2302
        %v2305 = vmul.f32 %v2297, %v2304
        %v2306 = vld [vmem:[%s9] sm:$0xff]
        %v2307 = vld [vmem:[%s9 + $0x8] sm:$0xff]
        %v2308 = vld [vmem:[%s9 + $0x10] sm:$0xff]
        %v2309 = vld [vmem:[%s9 + $0x18] sm:$0xff]
        %v2310 = vld [vmem:[%s9 + $0x20] sm:$0xff]
        %v2311 = vld [vmem:[%s9 + $0x28] sm:$0xff]
        %v2312 = vld [vmem:[%s9 + $0x30] sm:$0xff]
        %v2313 = vld [vmem:[%s9 + $0x38] sm:$0xff]
        %v2314 = vld [vmem:[%s10] sm:$0x1]
        %v2316 = vsel %vm1551, %v2305, 0
        %2318 = vmatpush.msra.mxu0 0.0
        %2319 = vmatpush.msra.mxu0 0.0
        %2320 = vmatpush.msra.mxu0 0.0
        %2321 = vmatpush.msra.mxu0 0.0
        %2322 = vmatpush.msra.mxu0 0.0
        %2323 = vmatpush.msra.mxu0 0.0
        %2324 = vmatpush.msra.mxu0 0.0
        %2325 = vmatpush.msra.mxu0 0.0
        %2326 = vmatpush.msra.mxu0 %v2313
        %2327 = vmatpush.msra.mxu0 %v2312
        %2328 = vmatpush.msra.mxu0 %v2311
        %2329 = vmatpush.msra.mxu0 %v2310
        %2330 = vmatpush.msra.mxu0 %v2309
        %2331 = vmatpush.msra.mxu0 %v2308
        %2332 = vmatpush.msra.mxu0 %v2307
        %2333 = vmatpush.msra.mxu0 %v2306
        %2334 = vmatmul.f32.gmra.mxu0 %v2316
        %v2335 = vpop.f32.mrf.mxu0
        %v2336 = vadd.f32 %v2314, %v2335
        %2337 = vdwg.mxu0
        %vm2338 = vcmask 40960
        %2339 = vst.msk [vmem:[%s378] sm:$0x1] %vm2338, %v2336
        %s2340 = sand.u32 %s269, 1
        %s2341 = scalar_lea.sflag [#allocation6], %s2340
        %s2342 = sand.u32 %s269, 1
        %s2343 = scalar_lea.vmem [#allocation5], %s2342
        // Predicated region
        $region65: #{classifier_forward.1} parent=63 // pred_check
          %p2344 = pneg %p279
        $region66: #{classifier_forward.1} parent=63 // pred_check_branch
          %2346 = sbr.rel (%p2344) target = $region68
        $region67: #{classifier_forward.1} parent=63 // pred_region
          %2348 = vsyncadd %s2341, 0
          %s2349 = scalar_lea.hbm %s11, %s25
          %s2351 = sshll.u32 %s2343, 4
          %s2352 = int_to_ptr.vmem [resolvable:$true] %s2351
          %s2353 = sshll.u32 %s2349, 4
          %s2354 = int_to_ptr.hbm [resolvable:$true] %s2353
          %2356 = dma.vmem_to_hbm [thread:$0]  %s2352, 16, %s2354, %s2341
        $region68: #{classifier_forward.1} parent=63 // pred_fallthru
          _
      $region64: #{classifier_forward.1} parent=5 // pred_fallthru
        _
      %p2357 = scmp.le.s32.totalorder 2, %s20
      // Predicated region
      $region69: #{classifier_forward.1} parent=5 // pred_check
        %p2358 = pneg %p2357
      $region70: #{classifier_forward.1} parent=5 // pred_check_branch
        %2360 = sbr.rel (%p2358) target = $region72
      $region71: #{classifier_forward.1} parent=5 // pred_region
        %s2361 = ssub.s32 %s20, 2
        // Predicated region
        $region73: #{classifier_forward.1} parent=71 // pred_check
          %p2362 = pneg %p285
        $region74: #{classifier_forward.1} parent=71 // pred_check_branch
          %2364 = sbr.rel (%p2362) target = $region76
        $region75: #{classifier_forward.1} parent=71 // pred_region
          %s2365 = sand.u32 %s270, 1
          %s2366 = scalar_lea.sflag [#allocation6], %s2365
          %s2367 = sand.u32 %s270, 1
          %s2368 = scalar_lea.vmem [#allocation5], %s2367
          %2370 = dma.done %s2366, 16
        $region76: #{classifier_forward.1} parent=71 // pred_fallthru
          _
      $region72: #{classifier_forward.1} parent=5 // pred_fallthru
        _
    $region6: #{classifier_forward.1} parent=1 // loop_footer
      %s24 = sadd.s32 1, %s20
    $region7: #{classifier_forward.1} parent=1 // loop_footer_branch
      %19 = sbr.rel target = $region3
    $region8: #{classifier_forward.1} parent=1 // loop_exit
      _
    %2371 = vsyncpa [#allocation6], 1
    %s2372 = scalar_lea.sflag [#allocation6], 1
    %2373 = vsyncpa %s2372, 1

</llo_original>
